<compile_context>
chip_gen: v7x
topology: tpu7x:2x2x1
jax: 0.10.0
libtpu: 0.0.40
codegen_flags: <defaults>
</compile_context>

<pallas_src>
import math

import numpy as np
import jax
import jax.numpy as jnp
from jax import lax
from jax.experimental import pallas as pl
from jax.experimental.pallas import tpu as pltpu


_MASK_FILL = -1000000000.0  # exact fill value used by the PyTorch module


def _make_attn_kernel(use_bf16_mxu: bool):
    """Builds the kernel body.  `use_bf16_mxu` feeds the MXU bf16 operands when
    inputs are f32 (accumulation stays f32)."""

    def kernel(q_ref, k_ref, v_ref, mask_ref, ctx_ref, attn_ref):
        # q_ref:    (G, TQ, D)
        # k_ref:    (G, S,  D)   resident across query tiles, single-buffered
        # v_ref:    (G, S,  D)   resident across query tiles, single-buffered
        # mask_ref: (Gm, TQm, S) Gm in {1, G}; TQm in {TQ, S}; bool/int8
        # ctx_ref:  (G, TQ, D)
        # attn_ref: (G, TQ, S)
        tq = q_ref.shape[1]
        d = q_ref.shape[-1]
        scale = float(1.0 / math.sqrt(d))  # weak python float: keeps q dtype

        in_dt = q_ref.dtype
        mxu_dt = jnp.bfloat16 if (use_bf16_mxu and in_dt == jnp.float32) else in_dt

        # Fold 1/sqrt(D) into Q: S*D multiplies instead of scaling S*S scores.
        q = (q_ref[...] * scale).astype(mxu_dt)
        k = k_ref[...].astype(mxu_dt)

        # scores = (Q*scale) @ K^T, batched over G, contraction on the last dim
        # of both operands (no explicit k.T / XLU relayout), f32 accumulation.
        scores = lax.dot_general(
            q, k,
            dimension_numbers=(((2,), (2,)), ((0,), (0,))),
            preferred_element_type=jnp.float32,
        )  # (G, TQ, S) f32

        # masked_fill_(attn_mask, -1e9).  The mask block either matches the
        # query tile or is a resident full-S slab, in which case we slice the
        # current TQ rows; broadcast over G happens implicitly in jnp.where.
        if mask_ref.shape[1] == tq:
            mv = mask_ref[...]
        else:
            start = pl.multiple_of(pl.program_id(1) * tq, tq)
            mv = mask_ref[:, pl.ds(start, tq), :]
        pred = mv if mv.dtype == jnp.bool_ else (mv != 0)
        scores = jnp.where(pred, jnp.float32(_MASK_FILL), scores)

        # Numerically stable softmax over the key dimension.  attn is a
        # user-visible output, so use the exact reciprocal (it is over a
        # (G, TQ, 1) vector -> cheap) instead of the EUP approximation.
        m = jnp.max(scores, axis=-1, keepdims=True)
        e = jnp.exp(scores - m)
        denom = jnp.sum(e, axis=-1, keepdims=True)
        attn = e * pl.reciprocal(denom, approx=False)

        # dropout_rate = 0.0 in the module -> identity.
        # TODO(synk): nonzero dropout needs pltpu.prng_seed + stateful_bernoulli.

        # context = attn @ V (MXU-friendly operand dtypes, f32 accumulation).
        ctx = lax.dot_general(
            attn.astype(mxu_dt), v_ref[...].astype(mxu_dt),
            dimension_numbers=(((2,), (1,)), ((0,), (0,))),
            preferred_element_type=jnp.float32,
        )  # (G, TQ, D) f32

        attn_ref[...] = attn.astype(attn_ref.dtype)
        ctx_ref[...] = ctx.astype(ctx_ref.dtype)

    return kernel


def _vmem_capacity_bytes() -> int:
    """Physical VMEM per TensorCore (128 MiB v5e/v6e, 64 MiB v7x)."""
    try:
        cap = getattr(pltpu.get_tpu_info(), "vmem_capacity_bytes", None)
        if cap:
            return int(cap)
    except Exception:
        pass
    return 64 << 20  # conservative default (v7x per-core VMEM)


def _prepare_mask(attn_mask, B, H, S):
    """Flatten a broadcastable mask and classify how it replicates over (B, H).

    Returns (mask_3d, kind), kind in {"shared", "per_b", "per_bh"}, so the mask
    BlockSpec can skip re-reading S^2 slabs that are replicated over heads or
    batch.  The mask keeps its 1-byte dtype (no wrapper-side astype pass)."""
    m = jnp.asarray(attn_mask)
    while m.ndim < 4:
        m = m[None]
    if m.shape[-2:] != (S, S):  # row/col-broadcast masks: materialize once
        m = jnp.broadcast_to(m, m.shape[:2] + (S, S))
    mb, mh = m.shape[0], m.shape[1]
    if mb == 1 and mh == 1:
        return m.reshape(1, S, S), "shared"
    if mb == B and mh == 1:
        return m.reshape(B, S, S), "per_b"
    m = jnp.broadcast_to(m, (B, H, S, S))
    return m.reshape(B * H, S, S), "per_bh"


def _choose_group(bh, h, s, mask_kind):
    """(batch, head) pairs fused per grid step.  Small S fuses several heads to
    amortize the ~0.35us per-step overhead; large S keeps VMEM bounded (G=1)."""
    if s >= 128:
        return 1
    for g in (8, 4, 2, 1):
        if bh % g:
            continue
        if mask_kind == "per_b" and h % g:
            continue  # group must stay inside one batch for a per-batch mask
        return g
    return 1


def _choose_tq(S, need_fn, budget):
    """Largest query tile (multiple of 8, divides S) whose VMEM estimate fits."""
    cands = [c for c in (512, 256, 128, 64, 32, 16, 8) if S % c == 0]
    if not cands:
        # TODO(synk): irregular S reverts to TQ = S (O(S^2) VMEM per step);
        # pad S to a multiple of 8 upstream for long irregular sequences.
        return S
    for tq in cands:
        if need_fn(tq) <= budget:
            return tq
    return cands[-1]


def scaled_dot_product_attention(Q, K, V, attn_mask, *,
                                 prefer_bf16_matmul=True, attn_out_dtype=None):
    """Pallas implementation of ScaledDotProductAttention.forward.

    Q, K, V: [B, H, S, D]; attn_mask broadcastable to [B, H, S, S]
    (True / nonzero == mask out).  Returns (context, attn).

    prefer_bf16_matmul: feed the MXU bf16 operands (f32 accumulation) when
      inputs are f32; set False if exact-f32 scores are required.
    attn_out_dtype: optional narrower dtype (e.g. jnp.bfloat16) for the
      returned attention matrix, halving the dominant BH*S^2 writeback."""
    assert attn_mask is not None, "the module unconditionally applies attn_mask"
    B, H, S, D = Q.shape
    BH = B * H

    q = Q.reshape(BH, S, D)
    k = K.reshape(BH, S, D)
    v = V.reshape(BH, S, D)
    mask, mask_kind = _prepare_mask(attn_mask, B, H, S)

    attn_dtype = jnp.dtype(attn_out_dtype) if attn_out_dtype is not None else Q.dtype
    in_isz = jnp.dtype(Q.dtype).itemsize
    out_isz = in_isz
    attn_isz = jnp.dtype(attn_dtype).itemsize
    mask_isz = jnp.dtype(mask.dtype).itemsize

    vmem_cap = _vmem_capacity_bytes()       # 128 MiB v5e/v6e, 64 MiB v7x
    budget = (vmem_cap * 3) // 4            # tile-fitting budget with headroom

    G = _choose_group(BH, H, S, mask_kind)
    # Resident full-(S, S) mask slab when the mask is shared / per-batch and small.
    mask_resident = (mask_kind != "per_bh") and (S * S * mask_isz <= budget // 4)
    mask_group = G if mask_kind == "per_bh" else 1

    def need(tq):  # per-step VMEM estimate: pipelined blocks + f32 temporaries
        mask_bytes = (S * S * mask_isz) if mask_resident \
            else (2 * mask_group * tq * S * mask_isz)
        return (2 * G * tq * D * in_isz          # Q block (double-buffered)
                + 2 * G * S * D * in_isz         # K + V (single-buffered, resident)
                + mask_bytes
                + 2 * G * tq * D * out_isz       # ctx block
                + 2 * G * tq * S * attn_isz      # attn block
                + 4 * G * tq * S * 4)            # scores / e / attn f32 temps (+slop)

    TQ = _choose_tq(S, need, budget)
    grid = (BH // G, S // TQ)
    vmem_limit = int(min(max(need(TQ) + G * S * D * in_isz + (8 << 20), 32 << 20),
                         (vmem_cap * 7) // 8))

    # Mask BlockSpec: collapse broadcast axes; resident slab when it fits.
    if mask_kind == "per_bh":
        mask_spec_args = ((G, TQ, S), lambda g, t: (g, t, 0))
        mask_single = False
    elif mask_resident:
        if mask_kind == "per_b":
            mask_spec_args = ((1, S, S), lambda g, t: ((g * G) // H, 0, 0))
        else:  # shared: DMA'd once, resident for the whole kernel
            mask_spec_args = ((1, S, S), lambda g, t: (0, 0, 0))
        mask_single = True
    else:
        if mask_kind == "per_b":
            mask_spec_args = ((1, TQ, S), lambda g, t: ((g * G) // H, t, 0))
        else:
            mask_spec_args = ((1, TQ, S), lambda g, t: (0, t, 0))
        mask_single = False

    kernel = _make_attn_kernel(prefer_bf16_matmul)

    def build_and_call(use_single_buffer, mask_arr):
        kv_buf = dict(pipeline_mode=pl.Buffered(1)) if use_single_buffer else {}
        mk_buf = kv_buf if (use_single_buffer and mask_single) else {}
        grid_spec = pltpu.PrefetchScalarGridSpec(
            num_scalar_prefetch=0,
            grid=grid,
            in_specs=[
                pl.BlockSpec((G, TQ, D), lambda g, t: (g, t, 0)),        # Q
                pl.BlockSpec((G, S, D), lambda g, t: (g, 0, 0), **kv_buf),  # K
                pl.BlockSpec((G, S, D), lambda g, t: (g, 0, 0), **kv_buf),  # V
                pl.BlockSpec(*mask_spec_args, **mk_buf),                 # mask
            ],
            out_specs=[
                pl.BlockSpec((G, TQ, D), lambda g, t: (g, t, 0)),        # context
                pl.BlockSpec((G, TQ, S), lambda g, t: (g, t, 0)),        # attn
            ],
        )
        return pl.pallas_call(
            kernel,
            out_shape=(
                jax.ShapeDtypeStruct((BH, S, D), Q.dtype),
                jax.ShapeDtypeStruct((BH, S, S), attn_dtype),
            ),
            grid_spec=grid_spec,
            compiler_params=pltpu.CompilerParams(
                # Shard the BH axis across v7x's two TensorCores so each core
                # keeps its own resident K/V; query-tile axis stays sequential.
                dimension_semantics=("parallel", "arbitrary"),
                vmem_limit_bytes=vmem_limit,
            ),
        )(q, k, v, mask_arr)

    try:
        ctx, attn = build_and_call(True, mask)
    except Exception:
        # Fallback for older runtimes: default double-buffering everywhere and
        # an int8 mask in case bool kernel inputs are rejected.
        fb_mask = mask.astype(jnp.int8) if mask.dtype == jnp.bool_ else mask
        ctx, attn = build_and_call(False, fb_mask)

    return ctx.reshape(B, H, S, D), attn.reshape(B, H, S, S)


def _reference(Q, K, V, attn_mask):
    """Plain-JAX reference (same math as the PyTorch module, f32 throughout)."""
    D = K.shape[-1]
    scores = jnp.einsum("bhqd,bhkd->bhqk", Q, K) / np.sqrt(D)
    mask = jnp.broadcast_to(jnp.asarray(attn_mask, dtype=bool), scores.shape)
    scores = jnp.where(mask, _MASK_FILL, scores)
    attn = jax.nn.softmax(scores, axis=-1)
    ctx = jnp.einsum("bhqk,bhkd->bhqd", attn, V)
    return ctx, attn


if __name__ == "__main__":
    master_key = jax.random.PRNGKey(0)

    def run_case(B, H, S, D, mask, key):
        kq, kk, kv = jax.random.split(key, 3)
        Q = jax.random.normal(kq, (B, H, S, D), dtype=jnp.float32)
        K = jax.random.normal(kk, (B, H, S, D), dtype=jnp.float32)
        V = jax.random.normal(kv, (B, H, S, D), dtype=jnp.float32)
        ctx, attn = scaled_dot_product_attention(Q, K, V, mask)
        jax.block_until_ready((ctx, attn))
        ctx_ref, attn_ref = _reference(Q, K, V, mask)
        # Tolerances account for bf16 MXU operands (prefer_bf16_matmul=True).
        assert jnp.allclose(attn, attn_ref, atol=2e-2, rtol=2e-2)
        assert jnp.allclose(ctx, ctx_ref, atol=2e-2, rtol=2e-2)
        # Softmax rows must sum to ~1 (normalization is exact f32 in-kernel).
        assert jnp.allclose(jnp.sum(attn.astype(jnp.float32), axis=-1), 1.0, atol=1e-3)

    B, H, S, D = 2, 2, 8, 32
    causal = jnp.triu(jnp.ones((S, S), dtype=jnp.bool_), k=1)
    k1, k2, k3 = jax.random.split(master_key, 3)

    # 1) full per-(batch, head) bool mask -> per_bh path, G > 1 (small S).
    run_case(B, H, S, D, jnp.broadcast_to(causal, (B, H, S, S)), k1)
    # 2) mask shared across batch & heads -> resident (S, S) mask path.
    run_case(B, H, S, D, causal[None, None], k2)
    # 3) longer sequence -> G = 1, K/V block index changes across grid steps.
    S2 = 128
    causal2 = jnp.triu(jnp.ones((S2, S2), dtype=jnp.bool_), k=1)
    run_case(B, H, S2, D, jnp.broadcast_to(causal2, (B, H, S2, S2)), k3)

    print("KERNEL_OK")
</pallas_src>

<mosaic_0001>
module attributes {stable_mosaic.version = 11 : i64} {
  func.func @kernel(%arg0: i32, %arg1: i32, %arg2: memref<4x8x32xf32, #tpu.memory_space<vmem>>, %arg3: memref<4x8x32xf32, #tpu.memory_space<vmem>>, %arg4: memref<4x8x32xf32, #tpu.memory_space<vmem>>, %arg5: memref<4x8x8xi32, #tpu.memory_space<vmem>>, %arg6: memref<4x8x32xf32, #tpu.memory_space<vmem>>, %arg7: memref<4x8x8xf32, #tpu.memory_space<vmem>>) attributes {dimension_semantics = [#tpu.dimension_semantics<parallel>, #tpu.dimension_semantics<arbitrary>], iteration_bounds = array<i64: 1, 1>, scalar_prefetch = 0 : i64, scratch_operands = 0 : i64, tpu.core_type = #tpu.core_type<tc>, window_params = [{transform_indices = @transform_0, window_bounds = array<i64: 4, 8, 32>}, {pipeline_mode = #tpu.pipeline_mode<synchronous>, transform_indices = @transform_1, window_bounds = array<i64: 4, 8, 32>}, {pipeline_mode = #tpu.pipeline_mode<synchronous>, transform_indices = @transform_2, window_bounds = array<i64: 4, 8, 32>}, {transform_indices = @transform_3, window_bounds = array<i64: 4, 8, 8>}, {transform_indices = @transform_4, window_bounds = array<i64: 4, 8, 32>}, {transform_indices = @transform_5, window_bounds = array<i64: 4, 8, 8>}]} {
    %c0 = arith.constant 0 : index
    %c0_0 = arith.constant 0 : index
    %c0_1 = arith.constant 0 : index
    %0 = vector.load %arg2[%c0, %c0_0, %c0_1] : memref<4x8x32xf32, #tpu.memory_space<vmem>>, vector<4x8x32xf32>
    %cst = arith.constant 0.176776692 : f32
    %1 = vector.broadcast %cst : f32 to vector<4x8x32xf32>
    %2 = arith.mulf %0, %1 : vector<4x8x32xf32>
    %3 = arith.truncf %2 : vector<4x8x32xf32> to vector<4x8x32xbf16>
    %c0_2 = arith.constant 0 : index
    %c0_3 = arith.constant 0 : index
    %c0_4 = arith.constant 0 : index
    %4 = vector.load %arg3[%c0_2, %c0_3, %c0_4] : memref<4x8x32xf32, #tpu.memory_space<vmem>>, vector<4x8x32xf32>
    %5 = arith.truncf %4 : vector<4x8x32xf32> to vector<4x8x32xbf16>
    %cst_5 = arith.constant dense<0.000000e+00> : vector<4x8x8xf32>
    %6 = tpu.matmul %3, %5, %cst_5 {dimension_numbers = #tpu.dot_dimension_numbers<[2], [2], [1], [1], [0, 0, 0, 1, 1, 1], [0], [0]>} : vector<4x8x32xbf16>, vector<4x8x32xbf16>, vector<4x8x8xf32> -> vector<4x8x8xf32>
    %c0_6 = arith.constant 0 : index
    %c0_7 = arith.constant 0 : index
    %c0_8 = arith.constant 0 : index
    %7 = vector.load %arg5[%c0_6, %c0_7, %c0_8] : memref<4x8x8xi32, #tpu.memory_space<vmem>>, vector<4x8x8xi32>
    %cst_9 = arith.constant dense<0> : vector<4x8x8xi32>
    %8 = arith.cmpi ne, %7, %cst_9 : vector<4x8x8xi32>
    %cst_10 = arith.constant -1.000000e+09 : f32
    %9 = vector.broadcast %cst_10 : f32 to vector<4x8x8xf32>
    %10 = arith.select %8, %9, %6 : vector<4x8x8xi1>, vector<4x8x8xf32>
    %cst_11 = arith.constant dense<0xFF800000> : vector<4x8xf32>
    %11 = vector.multi_reduction <maximumf>, %10, %cst_11 [2] : vector<4x8x8xf32> to vector<4x8xf32>
    %12 = vector.shape_cast %11 : vector<4x8xf32> to vector<4x8x1xf32>
    %13 = vector.broadcast %12 : vector<4x8x1xf32> to vector<4x8x8xf32>
    %14 = arith.subf %10, %13 : vector<4x8x8xf32>
    %15 = math.exp %14 : vector<4x8x8xf32>
    %cst_12 = arith.constant dense<0.000000e+00> : vector<4x8xf32>
    %16 = vector.multi_reduction <add>, %15, %cst_12 [2] : vector<4x8x8xf32> to vector<4x8xf32>
    %17 = vector.shape_cast %16 : vector<4x8xf32> to vector<4x8x1xf32>
    %18 = tpu.reciprocal %17 : vector<4x8x1xf32> -> vector<4x8x1xf32>
    %19 = vector.broadcast %18 : vector<4x8x1xf32> to vector<4x8x8xf32>
    %20 = arith.mulf %15, %19 : vector<4x8x8xf32>
    %21 = arith.truncf %20 : vector<4x8x8xf32> to vector<4x8x8xbf16>
    %c0_13 = arith.constant 0 : index
    %c0_14 = arith.constant 0 : index
    %c0_15 = arith.constant 0 : index
    %22 = vector.load %arg4[%c0_13, %c0_14, %c0_15] : memref<4x8x32xf32, #tpu.memory_space<vmem>>, vector<4x8x32xf32>
    %23 = arith.truncf %22 : vector<4x8x32xf32> to vector<4x8x32xbf16>
    %cst_16 = arith.constant dense<0.000000e+00> : vector<4x8x32xf32>
    %24 = tpu.matmul %21, %23, %cst_16 {dimension_numbers = #tpu.dot_dimension_numbers<[2], [1], [1], [2], [0, 0, 0, 1, 1, 2], [0], [0]>} : vector<4x8x8xbf16>, vector<4x8x32xbf16>, vector<4x8x32xf32> -> vector<4x8x32xf32>
    %c0_17 = arith.constant 0 : index
    %c0_18 = arith.constant 0 : index
    %c0_19 = arith.constant 0 : index
    %25 = vector.load %arg7[%c0_17, %c0_18, %c0_19] : memref<4x8x8xf32, #tpu.memory_space<vmem>>, vector<4x8x8xf32>
    tpu.vector_store %arg7[%c0_17, %c0_18, %c0_19], %20 {strides = array<i32>} : memref<4x8x8xf32, #tpu.memory_space<vmem>>, vector<4x8x8xf32>,
    %c0_20 = arith.constant 0 : index
    %c0_21 = arith.constant 0 : index
    %c0_22 = arith.constant 0 : index
    %26 = vector.load %arg6[%c0_20, %c0_21, %c0_22] : memref<4x8x32xf32, #tpu.memory_space<vmem>>, vector<4x8x32xf32>
    tpu.vector_store %arg6[%c0_20, %c0_21, %c0_22], %24 {strides = array<i32>} : memref<4x8x32xf32, #tpu.memory_space<vmem>>, vector<4x8x32xf32>,
    return
  }
  func.func @transform_0(%arg0: i32, %arg1: i32) -> (i32, i32, i32) {
    %c0_i32 = arith.constant 0 : i32
    %c0_i32_0 = arith.constant 0 : i32
    return %arg0, %arg1, %c0_i32 : i32, i32, i32
  }
  func.func @transform_1(%arg0: i32, %arg1: i32) -> (i32, i32, i32) {
    %c0_i32 = arith.constant 0 : i32
    %c0_i32_0 = arith.constant 0 : i32
    %c0_i32_1 = arith.constant 0 : i32
    return %arg0, %c0_i32, %c0_i32_0 : i32, i32, i32
  }
  func.func @transform_2(%arg0: i32, %arg1: i32) -> (i32, i32, i32) {
    %c0_i32 = arith.constant 0 : i32
    %c0_i32_0 = arith.constant 0 : i32
    %c0_i32_1 = arith.constant 0 : i32
    return %arg0, %c0_i32, %c0_i32_0 : i32, i32, i32
  }
  func.func @transform_3(%arg0: i32, %arg1: i32) -> (i32, i32, i32) {
    %c0_i32 = arith.constant 0 : i32
    %c0_i32_0 = arith.constant 0 : i32
    return %arg0, %arg1, %c0_i32 : i32, i32, i32
  }
  func.func @transform_4(%arg0: i32, %arg1: i32) -> (i32, i32, i32) {
    %c0_i32 = arith.constant 0 : i32
    %c0_i32_0 = arith.constant 0 : i32
    return %arg0, %arg1, %c0_i32 : i32, i32, i32
  }
  func.func @transform_5(%arg0: i32, %arg1: i32) -> (i32, i32, i32) {
    %c0_i32 = arith.constant 0 : i32
    %c0_i32_0 = arith.constant 0 : i32
    return %arg0, %arg1, %c0_i32 : i32, i32, i32
  }
}

module attributes {stable_mosaic.version = 11 : i64} {
  func.func @kernel(%arg0: i32, %arg1: i32, %arg2: memref<4x8x32xf32, #tpu.memory_space<vmem>>, %arg3: memref<4x8x32xf32, #tpu.memory_space<vmem>>, %arg4: memref<4x8x32xf32, #tpu.memory_space<vmem>>, %arg5: memref<4x8x8xi8, #tpu.memory_space<vmem>>, %arg6: memref<4x8x32xf32, #tpu.memory_space<vmem>>, %arg7: memref<4x8x8xf32, #tpu.memory_space<vmem>>) attributes {dimension_semantics = [#tpu.dimension_semantics<parallel>, #tpu.dimension_semantics<arbitrary>], iteration_bounds = array<i64: 1, 1>, scalar_prefetch = 0 : i64, scratch_operands = 0 : i64, tpu.core_type = #tpu.core_type<tc>, window_params = [{transform_indices = @transform_0, window_bounds = array<i64: 4, 8, 32>}, {transform_indices = @transform_1, window_bounds = array<i64: 4, 8, 32>}, {transform_indices = @transform_2, window_bounds = array<i64: 4, 8, 32>}, {transform_indices = @transform_3, window_bounds = array<i64: 4, 8, 8>}, {transform_indices = @transform_4, window_bounds = array<i64: 4, 8, 32>}, {transform_indices = @transform_5, window_bounds = array<i64: 4, 8, 8>}]} {
    %c0 = arith.constant 0 : index
    %c0_0 = arith.constant 0 : index
    %c0_1 = arith.constant 0 : index
    %0 = vector.load %arg2[%c0, %c0_0, %c0_1] : memref<4x8x32xf32, #tpu.memory_space<vmem>>, vector<4x8x32xf32>
    %cst = arith.constant 0.176776692 : f32
    %1 = vector.broadcast %cst : f32 to vector<4x8x32xf32>
    %2 = arith.mulf %0, %1 : vector<4x8x32xf32>
    %3 = arith.truncf %2 : vector<4x8x32xf32> to vector<4x8x32xbf16>
    %c0_2 = arith.constant 0 : index
    %c0_3 = arith.constant 0 : index
    %c0_4 = arith.constant 0 : index
    %4 = vector.load %arg3[%c0_2, %c0_3, %c0_4] : memref<4x8x32xf32, #tpu.memory_space<vmem>>, vector<4x8x32xf32>
    %5 = arith.truncf %4 : vector<4x8x32xf32> to vector<4x8x32xbf16>
    %cst_5 = arith.constant dense<0.000000e+00> : vector<4x8x8xf32>
    %6 = tpu.matmul %3, %5, %cst_5 {dimension_numbers = #tpu.dot_dimension_numbers<[2], [2], [1], [1], [0, 0, 0, 1, 1, 1], [0], [0]>} : vector<4x8x32xbf16>, vector<4x8x32xbf16>, vector<4x8x8xf32> -> vector<4x8x8xf32>
    %c0_6 = arith.constant 0 : index
    %c0_7 = arith.constant 0 : index
    %c0_8 = arith.constant 0 : index
    %7 = vector.load %arg5[%c0_6, %c0_7, %c0_8] : memref<4x8x8xi8, #tpu.memory_space<vmem>>, vector<4x8x8xi8>
    %c0_i8 = arith.constant 0 : i8
    %8 = vector.broadcast %c0_i8 : i8 to vector<4x8x8xi8>
    %9 = arith.cmpi ne, %7, %8 : vector<4x8x8xi8>
    %cst_9 = arith.constant -1.000000e+09 : f32
    %10 = vector.broadcast %cst_9 : f32 to vector<4x8x8xf32>
    %11 = arith.select %9, %10, %6 : vector<4x8x8xi1>, vector<4x8x8xf32>
    %cst_10 = arith.constant dense<0xFF800000> : vector<4x8xf32>
    %12 = vector.multi_reduction <maximumf>, %11, %cst_10 [2] : vector<4x8x8xf32> to vector<4x8xf32>
    %13 = vector.shape_cast %12 : vector<4x8xf32> to vector<4x8x1xf32>
    %14 = vector.broadcast %13 : vector<4x8x1xf32> to vector<4x8x8xf32>
    %15 = arith.subf %11, %14 : vector<4x8x8xf32>
    %16 = math.exp %15 : vector<4x8x8xf32>
    %cst_11 = arith.constant dense<0.000000e+00> : vector<4x8xf32>
    %17 = vector.multi_reduction <add>, %16, %cst_11 [2] : vector<4x8x8xf32> to vector<4x8xf32>
    %18 = vector.shape_cast %17 : vector<4x8xf32> to vector<4x8x1xf32>
    %19 = tpu.reciprocal %18 : vector<4x8x1xf32> -> vector<4x8x1xf32>
    %20 = vector.broadcast %19 : vector<4x8x1xf32> to vector<4x8x8xf32>
    %21 = arith.mulf %16, %20 : vector<4x8x8xf32>
    %22 = arith.truncf %21 : vector<4x8x8xf32> to vector<4x8x8xbf16>
    %c0_12 = arith.constant 0 : index
    %c0_13 = arith.constant 0 : index
    %c0_14 = arith.constant 0 : index
    %23 = vector.load %arg4[%c0_12, %c0_13, %c0_14] : memref<4x8x32xf32, #tpu.memory_space<vmem>>, vector<4x8x32xf32>
    %24 = arith.truncf %23 : vector<4x8x32xf32> to vector<4x8x32xbf16>
    %cst_15 = arith.constant dense<0.000000e+00> : vector<4x8x32xf32>
    %25 = tpu.matmul %22, %24, %cst_15 {dimension_numbers = #tpu.dot_dimension_numbers<[2], [1], [1], [2], [0, 0, 0, 1, 1, 2], [0], [0]>} : vector<4x8x8xbf16>, vector<4x8x32xbf16>, vector<4x8x32xf32> -> vector<4x8x32xf32>
    %c0_16 = arith.constant 0 : index
    %c0_17 = arith.constant 0 : index
    %c0_18 = arith.constant 0 : index
    %26 = vector.load %arg7[%c0_16, %c0_17, %c0_18] : memref<4x8x8xf32, #tpu.memory_space<vmem>>, vector<4x8x8xf32>
    tpu.vector_store %arg7[%c0_16, %c0_17, %c0_18], %21 {strides = array<i32>} : memref<4x8x8xf32, #tpu.memory_space<vmem>>, vector<4x8x8xf32>,
    %c0_19 = arith.constant 0 : index
    %c0_20 = arith.constant 0 : index
    %c0_21 = arith.constant 0 : index
    %27 = vector.load %arg6[%c0_19, %c0_20, %c0_21] : memref<4x8x32xf32, #tpu.memory_space<vmem>>, vector<4x8x32xf32>
    tpu.vector_store %arg6[%c0_19, %c0_20, %c0_21], %25 {strides = array<i32>} : memref<4x8x32xf32, #tpu.memory_space<vmem>>, vector<4x8x32xf32>,
    return
  }
  func.func @transform_0(%arg0: i32, %arg1: i32) -> (i32, i32, i32) {
    %c0_i32 = arith.constant 0 : i32
    %c0_i32_0 = arith.constant 0 : i32
    return %arg0, %arg1, %c0_i32 : i32, i32, i32
  }
  func.func @transform_1(%arg0: i32, %arg1: i32) -> (i32, i32, i32) {
    %c0_i32 = arith.constant 0 : i32
    %c0_i32_0 = arith.constant 0 : i32
    %c0_i32_1 = arith.constant 0 : i32
    return %arg0, %c0_i32, %c0_i32_0 : i32, i32, i32
  }
  func.func @transform_2(%arg0: i32, %arg1: i32) -> (i32, i32, i32) {
    %c0_i32 = arith.constant 0 : i32
    %c0_i32_0 = arith.constant 0 : i32
    %c0_i32_1 = arith.constant 0 : i32
    return %arg0, %c0_i32, %c0_i32_0 : i32, i32, i32
  }
  func.func @transform_3(%arg0: i32, %arg1: i32) -> (i32, i32, i32) {
    %c0_i32 = arith.constant 0 : i32
    %c0_i32_0 = arith.constant 0 : i32
    return %arg0, %arg1, %c0_i32 : i32, i32, i32
  }
  func.func @transform_4(%arg0: i32, %arg1: i32) -> (i32, i32, i32) {
    %c0_i32 = arith.constant 0 : i32
    %c0_i32_0 = arith.constant 0 : i32
    return %arg0, %arg1, %c0_i32 : i32, i32, i32
  }
  func.func @transform_5(%arg0: i32, %arg1: i32) -> (i32, i32, i32) {
    %c0_i32 = arith.constant 0 : i32
    %c0_i32_0 = arith.constant 0 : i32
    return %arg0, %arg1, %c0_i32 : i32, i32, i32
  }
}

</mosaic_0001>

<llo_original>
// kernel: tpu_custom_call.1
$region0: #{tpu_custom_call.1}
  #allocation0 [shape = 'u32[]', space=smem, size = 0x4, offset = 0x4, fixed_abs, tag = 'smem constant byte address 0x4 - core index']
  #allocation1 [shape = 'u32[144,128]{1,0:T(1,128)}', space=vmem, size = 0x12000, scoped, tag = 'internal scratch']
  %s0 = inlined_call_operand.vmem [shape: f32[4,8,32], index: 0, kind: input, shape index: {}]
  %s1 = inlined_call_operand.hbm [shape: f32[4,8,32], index: 1, kind: input, shape index: {}]
  %s2 = inlined_call_operand.hbm [shape: f32[4,8,32], index: 2, kind: input, shape index: {}]
  %s3 = inlined_call_operand.vmem [shape: s32[4,8,8], index: 3, kind: input, shape index: {}]
  %s4 = inlined_call_operand.hbm [shape: f32[4,8,32], index: 4, kind: output, shape index: {0}]
  %s5 = inlined_call_operand.hbm [shape: f32[4,8,8], index: 5, kind: output, shape index: {1}]
  %6 = xla_tuple %s4, %s5
  %s7 = sld [smem:[#allocation0]]
  $region42: #{tpu_custom_call.1} parent=0
    _
  %s9 = ssub.s32 1, %s7
  %s10 = scalar_select 0, %s9, %s7
  $region1: #{tpu_custom_call.1} parent=0
    #allocation2 [shape = 'u8[16384]{0}', space=vmem, size = 0x4000, scoped, tag = 'input window, operand 1, single buffered']
    #allocation3 [shape = 's32[1]{0}', space=sflag, size = 0x4, scoped, tag = 'scoped memory for tpu_custom_call.1']
    #allocation4 [shape = 's32[1]{0}', space=sflag, size = 0x4, scoped, tag = 'scoped memory for tpu_custom_call.1']
    #allocation5 [shape = 'u8[16384]{0}', space=vmem, size = 0x4000, scoped, tag = 'input window, operand 2, single buffered']
    #allocation6 [shape = 's32[1]{0}', space=sflag, size = 0x4, scoped, tag = 'scoped memory for tpu_custom_call.1']
    #allocation7 [shape = 'u8[16384]{0}', space=vmem, size = 0x4000, scoped, tag = 'output window, operand 0, single buffered']
    #allocation8 [shape = 'u8[16384]{0}', space=vmem, size = 0x4000, scoped, tag = 'output window, operand 1, single buffered']
    #allocation9 [shape = 's32[1]{0}', space=sflag, size = 0x4, scoped, tag = 'scoped memory for tpu_custom_call.1']
    %11 = vsyncpa [#allocation3], 0
    %12 = vsyncpa [#allocation6], 0
    %13 = vsyncpa [#allocation4], 0
    %14 = vsyncpa [#allocation9], 0
    // Predicated region
    $region2: #{tpu_custom_call.1} parent=1 // pred_check
      _
    $region3: #{tpu_custom_call.1} parent=1 // pred_check_branch
      %16 = sbr.rel (0) target = $region5
    $region4: #{tpu_custom_call.1} parent=1 // pred_region
      _
    $region5: #{tpu_custom_call.1} parent=1 // pred_fallthru
      _
    // Predicated region
    $region6: #{tpu_custom_call.1} parent=1 // pred_check
      _
    $region7: #{tpu_custom_call.1} parent=1 // pred_check_branch
      %18 = sbr.rel (0) target = $region9
    $region8: #{tpu_custom_call.1} parent=1 // pred_region
      %s20 = ssub.s32 512, 512
      %21 = vsyncadd [#allocation3], %s20
      %s22 = sshll.u32 [#allocation2], 4
      %s23 = int_to_ptr.vmem [resolvable:$true] %s22
      %28 = dma.hbm_to_vmem [thread:$0]  %s1, 512, %s23, [#allocation3], 128, 128, 8
    $region9: #{tpu_custom_call.1} parent=1 // pred_fallthru
      _
    // Predicated region
    $region10: #{tpu_custom_call.1} parent=1 // pred_check
      _
    $region11: #{tpu_custom_call.1} parent=1 // pred_check_branch
      %30 = sbr.rel (0) target = $region13
    $region12: #{tpu_custom_call.1} parent=1 // pred_region
      %s32 = ssub.s32 512, 512
      %33 = vsyncadd [#allocation6], %s32
      %s34 = sshll.u32 [#allocation5], 4
      %s35 = int_to_ptr.vmem [resolvable:$true] %s34
      %40 = dma.hbm_to_vmem [thread:$0]  %s2, 512, %s35, [#allocation6], 128, 128, 8
    $region13: #{tpu_custom_call.1} parent=1 // pred_fallthru
      _
    // Predicated region
    $region14: #{tpu_custom_call.1} parent=1 // pred_check
      _
    $region15: #{tpu_custom_call.1} parent=1 // pred_check_branch
      %42 = sbr.rel (0) target = $region17
    $region16: #{tpu_custom_call.1} parent=1 // pred_region
      _
    $region17: #{tpu_custom_call.1} parent=1 // pred_fallthru
      _
    // Predicated region
    $region18: #{tpu_custom_call.1} parent=1 // pred_check
      _
    $region19: #{tpu_custom_call.1} parent=1 // pred_check_branch
      %44 = sbr.rel (0) target = $region21
    $region20: #{tpu_custom_call.1} parent=1 // pred_region
      %45 = dma.done [#allocation3], 512
    $region21: #{tpu_custom_call.1} parent=1 // pred_fallthru
      _
    // Predicated region
    $region22: #{tpu_custom_call.1} parent=1 // pred_check
      _
    $region23: #{tpu_custom_call.1} parent=1 // pred_check_branch
      %47 = sbr.rel (0) target = $region25
    $region24: #{tpu_custom_call.1} parent=1 // pred_region
      %48 = dma.done [#allocation6], 512
    $region25: #{tpu_custom_call.1} parent=1 // pred_fallthru
      _
    %v50 = vld [vmem:[%s0] sm:$0xff]
    %v51 = vld [vmem:[%s0 + $0x8] sm:$0xff]
    %v52 = vld [vmem:[%s0 + $0x10] sm:$0xff]
    %v53 = vld [vmem:[%s0 + $0x18] sm:$0xff]
    %v54 = vmul.f32 %v50, 0.17677669
    %v55 = vmul.f32 %v51, 0.17677669
    %v56 = vmul.f32 %v52, 0.17677669
    %v57 = vmul.f32 %v53, 0.17677669
    %v58 = vpack.c.bf16 %v54, %v54
    %v59 = vpack.c.bf16 %v55, %v55
    %v60 = vpack.c.bf16 %v56, %v56
    %v61 = vpack.c.bf16 %v57, %v57
    %v62 = vld [vmem:[#allocation2] sm:$0xff]
    %v63 = vld [vmem:[#allocation2 + $0x8] sm:$0xff]
    %v64 = vld [vmem:[#allocation2 + $0x10] sm:$0xff]
    %v65 = vld [vmem:[#allocation2 + $0x18] sm:$0xff]
    %v66 = vpack.c.bf16 %v62, %v62
    %v67 = vpack.c.bf16 %v63, %v63
    %v68 = vpack.c.bf16 %v64, %v64
    %v69 = vpack.c.bf16 %v65, %v65
    %vm70 = vcmask 261120
    %v72 = vsel %vm70, %v58, 0
    %v75 = vsel %vm70, %v66, 0
    %77 = vmatprep.subr.bf16.mxu0 0
    %78 = vmatpush1.bf16.xpose.msra.mxu0 %v75
    %79 = vmatprep.subr.bf16.mxu0 0
    %80 = vmatpush1.bf16.xpose.msra.mxu0 0
    %81 = vmatprep.subr.bf16.mxu0 0
    %82 = vmatpush1.bf16.xpose.msra.mxu0 0
    %83 = vmatprep.subr.bf16.mxu0 0
    %84 = vmatpush1.bf16.xpose.msra.mxu0 0
    %85 = vmatprep.subr.bf16.mxu0 0
    %86 = vmatpush1.bf16.xpose.msra.mxu0 0
    %87 = vmatprep.subr.bf16.mxu0 0
    %88 = vmatpush1.bf16.xpose.msra.mxu0 0
    %89 = vmatprep.subr.bf16.mxu0 0
    %90 = vmatpush1.bf16.xpose.msra.mxu0 0
    %91 = vmatprep.subr.bf16.mxu0 0
    %92 = vmatpush1.bf16.xpose.msra.mxu0 0
    %93 = vmatprep.subr.bf16.mxu0 0
    %94 = vmatpush1.bf16.xpose.msra.mxu0 0
    %95 = vmatprep.subr.bf16.mxu0 0
    %96 = vmatpush1.bf16.xpose.msra.mxu0 0
    %97 = vmatprep.subr.bf16.mxu0 0
    %98 = vmatpush1.bf16.xpose.msra.mxu0 0
    %99 = vmatprep.subr.bf16.mxu0 0
    %100 = vmatpush1.bf16.xpose.msra.mxu0 0
    %101 = vmatprep.subr.bf16.mxu0 0
    %102 = vmatpush1.bf16.xpose.msra.mxu0 0
    %103 = vmatprep.subr.bf16.mxu0 0
    %104 = vmatpush1.bf16.xpose.msra.mxu0 0
    %105 = vmatprep.subr.bf16.mxu0 0
    %106 = vmatpush1.bf16.xpose.msra.mxu0 0
    %107 = vmatprep.subr.bf16.mxu0 0
    %108 = vmatpush1.bf16.xpose.msra.mxu0 0
    %109 = vmatprep.mubr.bf16.mxu0 0
    %110 = vmatmul.mubr.bf16.gmra.mrb[0].mxu0 %v72
    %v111 = vpop.f32.mrb[0].mxu0
    %v112 = vadd.f32 0.0, %v111
    %v113 = vpop.f32.mrb[0].mxu0
    %v114 = vpop.f32.mrb[0].mxu0
    %v115 = vpop.f32.mrb[0].mxu0
    %116 = vdwg.mxu0
    %v118 = vsel %vm70, %v59, 0
    %v121 = vsel %vm70, %v67, 0
    %123 = vmatprep.subr.bf16.mxu0 0
    %124 = vmatpush1.bf16.xpose.msra.mxu0 %v121
    %125 = vmatprep.subr.bf16.mxu0 0
    %126 = vmatpush1.bf16.xpose.msra.mxu0 0
    %127 = vmatprep.subr.bf16.mxu0 0
    %128 = vmatpush1.bf16.xpose.msra.mxu0 0
    %129 = vmatprep.subr.bf16.mxu0 0
    %130 = vmatpush1.bf16.xpose.msra.mxu0 0
    %131 = vmatprep.subr.bf16.mxu0 0
    %132 = vmatpush1.bf16.xpose.msra.mxu0 0
    %133 = vmatprep.subr.bf16.mxu0 0
    %134 = vmatpush1.bf16.xpose.msra.mxu0 0
    %135 = vmatprep.subr.bf16.mxu0 0
    %136 = vmatpush1.bf16.xpose.msra.mxu0 0
    %137 = vmatprep.subr.bf16.mxu0 0
    %138 = vmatpush1.bf16.xpose.msra.mxu0 0
    %139 = vmatprep.subr.bf16.mxu0 0
    %140 = vmatpush1.bf16.xpose.msra.mxu0 0
    %141 = vmatprep.subr.bf16.mxu0 0
    %142 = vmatpush1.bf16.xpose.msra.mxu0 0
    %143 = vmatprep.subr.bf16.mxu0 0
    %144 = vmatpush1.bf16.xpose.msra.mxu0 0
    %145 = vmatprep.subr.bf16.mxu0 0
    %146 = vmatpush1.bf16.xpose.msra.mxu0 0
    %147 = vmatprep.subr.bf16.mxu0 0
    %148 = vmatpush1.bf16.xpose.msra.mxu0 0
    %149 = vmatprep.subr.bf16.mxu0 0
    %150 = vmatpush1.bf16.xpose.msra.mxu0 0
    %151 = vmatprep.subr.bf16.mxu0 0
    %152 = vmatpush1.bf16.xpose.msra.mxu0 0
    %153 = vmatprep.subr.bf16.mxu0 0
    %154 = vmatpush1.bf16.xpose.msra.mxu0 0
    %155 = vmatprep.mubr.bf16.mxu0 0
    %156 = vmatmul.mubr.bf16.gmra.mrb[0].mxu0 %v118
    %v157 = vpop.f32.mrb[0].mxu0
    %v158 = vadd.f32 0.0, %v157
    %v159 = vpop.f32.mrb[0].mxu0
    %v160 = vpop.f32.mrb[0].mxu0
    %v161 = vpop.f32.mrb[0].mxu0
    %162 = vdwg.mxu0
    %v164 = vsel %vm70, %v60, 0
    %v167 = vsel %vm70, %v68, 0
    %169 = vmatprep.subr.bf16.mxu0 0
    %170 = vmatpush1.bf16.xpose.msra.mxu0 %v167
    %171 = vmatprep.subr.bf16.mxu0 0
    %172 = vmatpush1.bf16.xpose.msra.mxu0 0
    %173 = vmatprep.subr.bf16.mxu0 0
    %174 = vmatpush1.bf16.xpose.msra.mxu0 0
    %175 = vmatprep.subr.bf16.mxu0 0
    %176 = vmatpush1.bf16.xpose.msra.mxu0 0
    %177 = vmatprep.subr.bf16.mxu0 0
    %178 = vmatpush1.bf16.xpose.msra.mxu0 0
    %179 = vmatprep.subr.bf16.mxu0 0
    %180 = vmatpush1.bf16.xpose.msra.mxu0 0
    %181 = vmatprep.subr.bf16.mxu0 0
    %182 = vmatpush1.bf16.xpose.msra.mxu0 0
    %183 = vmatprep.subr.bf16.mxu0 0
    %184 = vmatpush1.bf16.xpose.msra.mxu0 0
    %185 = vmatprep.subr.bf16.mxu0 0
    %186 = vmatpush1.bf16.xpose.msra.mxu0 0
    %187 = vmatprep.subr.bf16.mxu0 0
    %188 = vmatpush1.bf16.xpose.msra.mxu0 0
    %189 = vmatprep.subr.bf16.mxu0 0
    %190 = vmatpush1.bf16.xpose.msra.mxu0 0
    %191 = vmatprep.subr.bf16.mxu0 0
    %192 = vmatpush1.bf16.xpose.msra.mxu0 0
    %193 = vmatprep.subr.bf16.mxu0 0
    %194 = vmatpush1.bf16.xpose.msra.mxu0 0
    %195 = vmatprep.subr.bf16.mxu0 0
    %196 = vmatpush1.bf16.xpose.msra.mxu0 0
    %197 = vmatprep.subr.bf16.mxu0 0
    %198 = vmatpush1.bf16.xpose.msra.mxu0 0
    %199 = vmatprep.subr.bf16.mxu0 0
    %200 = vmatpush1.bf16.xpose.msra.mxu0 0
    %201 = vmatprep.mubr.bf16.mxu0 0
    %202 = vmatmul.mubr.bf16.gmra.mrb[0].mxu0 %v164
    %v203 = vpop.f32.mrb[0].mxu0
    %v204 = vadd.f32 0.0, %v203
    %v205 = vpop.f32.mrb[0].mxu0
    %v206 = vpop.f32.mrb[0].mxu0
    %v207 = vpop.f32.mrb[0].mxu0
    %208 = vdwg.mxu0
    %v210 = vsel %vm70, %v61, 0
    %v213 = vsel %vm70, %v69, 0
    %215 = vmatprep.subr.bf16.mxu0 0
    %216 = vmatpush1.bf16.xpose.msra.mxu0 %v213
    %217 = vmatprep.subr.bf16.mxu0 0
    %218 = vmatpush1.bf16.xpose.msra.mxu0 0
    %219 = vmatprep.subr.bf16.mxu0 0
    %220 = vmatpush1.bf16.xpose.msra.mxu0 0
    %221 = vmatprep.subr.bf16.mxu0 0
    %222 = vmatpush1.bf16.xpose.msra.mxu0 0
    %223 = vmatprep.subr.bf16.mxu0 0
    %224 = vmatpush1.bf16.xpose.msra.mxu0 0
    %225 = vmatprep.subr.bf16.mxu0 0
    %226 = vmatpush1.bf16.xpose.msra.mxu0 0
    %227 = vmatprep.subr.bf16.mxu0 0
    %228 = vmatpush1.bf16.xpose.msra.mxu0 0
    %229 = vmatprep.subr.bf16.mxu0 0
    %230 = vmatpush1.bf16.xpose.msra.mxu0 0
    %231 = vmatprep.subr.bf16.mxu0 0
    %232 = vmatpush1.bf16.xpose.msra.mxu0 0
    %233 = vmatprep.subr.bf16.mxu0 0
    %234 = vmatpush1.bf16.xpose.msra.mxu0 0
    %235 = vmatprep.subr.bf16.mxu0 0
    %236 = vmatpush1.bf16.xpose.msra.mxu0 0
    %237 = vmatprep.subr.bf16.mxu0 0
    %238 = vmatpush1.bf16.xpose.msra.mxu0 0
    %239 = vmatprep.subr.bf16.mxu0 0
    %240 = vmatpush1.bf16.xpose.msra.mxu0 0
    %241 = vmatprep.subr.bf16.mxu0 0
    %242 = vmatpush1.bf16.xpose.msra.mxu0 0
    %243 = vmatprep.subr.bf16.mxu0 0
    %244 = vmatpush1.bf16.xpose.msra.mxu0 0
    %245 = vmatprep.subr.bf16.mxu0 0
    %246 = vmatpush1.bf16.xpose.msra.mxu0 0
    %247 = vmatprep.mubr.bf16.mxu0 0
    %248 = vmatmul.mubr.bf16.gmra.mrb[0].mxu0 %v210
    %v249 = vpop.f32.mrb[0].mxu0
    %v250 = vadd.f32 0.0, %v249
    %v251 = vpop.f32.mrb[0].mxu0
    %v252 = vpop.f32.mrb[0].mxu0
    %v253 = vpop.f32.mrb[0].mxu0
    %254 = vdwg.mxu0
    %v255 = vld [vmem:[%s3] sm:$0xff]
    %v256 = vld [vmem:[%s3 + $0x8] sm:$0xff]
    %v257 = vld [vmem:[%s3 + $0x10] sm:$0xff]
    %v258 = vld [vmem:[%s3 + $0x18] sm:$0xff]
    %vm259 = vcmp.ne.s32.totalorder %v255, 0
    %vm260 = vcmp.ne.s32.totalorder %v256, 0
    %vm261 = vcmp.ne.s32.totalorder %v257, 0
    %vm262 = vcmp.ne.s32.totalorder %v258, 0
    %v263 = vsel %vm259, -1e+09, %v112
    %v264 = vsel %vm260, -1e+09, %v158
    %v265 = vsel %vm261, -1e+09, %v204
    %v266 = vsel %vm262, -1e+09, %v250
    %vm267 = vcmask 64512
    %v268 = vsel %vm267, %v263, -inf
    %269 = vmax.xlane.f32.xlu0 %v268
    %v270 = vpop.xlane.xlu0 %269
    %v271 = vsel %vm267, %v264, -inf
    %272 = vmax.xlane.f32.xlu0 %v271
    %v273 = vpop.xlane.xlu0 %272
    %v274 = vsel %vm267, %v265, -inf
    %275 = vmax.xlane.f32.xlu0 %v274
    %v276 = vpop.xlane.xlu0 %275
    %v277 = vsel %vm267, %v266, -inf
    %278 = vmax.xlane.f32.xlu0 %v277
    %v279 = vpop.xlane.xlu0 %278
    %v280 = vsub.f32 %v263, %v270
    %v281 = vsub.f32 %v264, %v273
    %v282 = vsub.f32 %v265, %v276
    %v283 = vsub.f32 %v266, %v279
    %v284 = vmul.f32 %v280, 1.442695
    %v285 = vpow.pop %v284
    %v286 = vmul.f32 %v281, 1.442695
    %v287 = vpow.pop %v286
    %v288 = vmul.f32 %v282, 1.442695
    %v289 = vpow.pop %v288
    %v290 = vmul.f32 %v283, 1.442695
    %v291 = vpow.pop %v290
    %v292 = vsel %vm267, %v285, 0.0
    %293 = vadd.xlane.f32.xlu0 %v292
    %v294 = vpop.xlane.xlu0 %293
    %v295 = vsel %vm267, %v287, 0.0
    %296 = vadd.xlane.f32.xlu0 %v295
    %v297 = vpop.xlane.xlu0 %296
    %v298 = vsel %vm267, %v289, 0.0
    %299 = vadd.xlane.f32.xlu0 %v298
    %v300 = vpop.xlane.xlu0 %299
    %v301 = vsel %vm267, %v291, 0.0
    %302 = vadd.xlane.f32.xlu0 %v301
    %v303 = vpop.xlane.xlu0 %302
    %v304 = vrcp.pop %v294
    %v305 = vrcp.pop %v297
    %v306 = vrcp.pop %v300
    %v307 = vrcp.pop %v303
    %v308 = vmul.f32 %v285, %v304
    %v309 = vmul.f32 %v287, %v305
    %v310 = vmul.f32 %v289, %v306
    %v311 = vmul.f32 %v291, %v307
    %v312 = vpack.c.bf16 %v308, %v308
    %v313 = vpack.c.bf16 %v309, %v309
    %v314 = vpack.c.bf16 %v310, %v310
    %v315 = vpack.c.bf16 %v311, %v311
    %v316 = vld [vmem:[#allocation5] sm:$0xff]
    %v317 = vld [vmem:[#allocation5 + $0x8] sm:$0xff]
    %v318 = vld [vmem:[#allocation5 + $0x10] sm:$0xff]
    %v319 = vld [vmem:[#allocation5 + $0x18] sm:$0xff]
    %v320 = vpack.c.bf16 %v316, %v316
    %v321 = vpack.c.bf16 %v317, %v317
    %v322 = vpack.c.bf16 %v318, %v318
    %v323 = vpack.c.bf16 %v319, %v319
    %v325 = vsel %vm267, %v312, 0
    %vm327 = vcmask 1043456
    %v329 = vsel %vm327, %v320, 0
    %331 = vmatprep.subr.bf16.mxu0 0
    %332 = vmatpush1.bf16.msra.mxu0 %v329
    %333 = vmatprep.subr.bf16.mxu0 0
    %334 = vmatpush1.bf16.msra.mxu0 0
    %335 = vmatprep.subr.bf16.mxu0 0
    %336 = vmatpush1.bf16.msra.mxu0 0
    %337 = vmatprep.subr.bf16.mxu0 0
    %338 = vmatpush1.bf16.msra.mxu0 0
    %339 = vmatprep.subr.bf16.mxu0 0
    %340 = vmatpush1.bf16.msra.mxu0 0
    %341 = vmatprep.subr.bf16.mxu0 0
    %342 = vmatpush1.bf16.msra.mxu0 0
    %343 = vmatprep.subr.bf16.mxu0 0
    %344 = vmatpush1.bf16.msra.mxu0 0
    %345 = vmatprep.subr.bf16.mxu0 0
    %346 = vmatpush1.bf16.msra.mxu0 0
    %347 = vmatprep.subr.bf16.mxu0 0
    %348 = vmatpush1.bf16.msra.mxu0 0
    %349 = vmatprep.subr.bf16.mxu0 0
    %350 = vmatpush1.bf16.msra.mxu0 0
    %351 = vmatprep.subr.bf16.mxu0 0
    %352 = vmatpush1.bf16.msra.mxu0 0
    %353 = vmatprep.subr.bf16.mxu0 0
    %354 = vmatpush1.bf16.msra.mxu0 0
    %355 = vmatprep.subr.bf16.mxu0 0
    %356 = vmatpush1.bf16.msra.mxu0 0
    %357 = vmatprep.subr.bf16.mxu0 0
    %358 = vmatpush1.bf16.msra.mxu0 0
    %359 = vmatprep.subr.bf16.mxu0 0
    %360 = vmatpush1.bf16.msra.mxu0 0
    %361 = vmatprep.subr.bf16.mxu0 0
    %362 = vmatpush1.bf16.msra.mxu0 0
    %363 = vmatprep.mubr.bf16.mxu0 0
    %364 = vmatmul.mubr.bf16.gmra.mrb[0].mxu0 %v325
    %v365 = vpop.f32.mrb[0].mxu0
    %v366 = vadd.f32 0.0, %v365
    %v367 = vpop.f32.mrb[0].mxu0
    %v368 = vpop.f32.mrb[0].mxu0
    %v369 = vpop.f32.mrb[0].mxu0
    %370 = vdwg.mxu0
    %v372 = vsel %vm267, %v313, 0
    %v375 = vsel %vm327, %v321, 0
    %377 = vmatprep.subr.bf16.mxu0 0
    %378 = vmatpush1.bf16.msra.mxu0 %v375
    %379 = vmatprep.subr.bf16.mxu0 0
    %380 = vmatpush1.bf16.msra.mxu0 0
    %381 = vmatprep.subr.bf16.mxu0 0
    %382 = vmatpush1.bf16.msra.mxu0 0
    %383 = vmatprep.subr.bf16.mxu0 0
    %384 = vmatpush1.bf16.msra.mxu0 0
    %385 = vmatprep.subr.bf16.mxu0 0
    %386 = vmatpush1.bf16.msra.mxu0 0
    %387 = vmatprep.subr.bf16.mxu0 0
    %388 = vmatpush1.bf16.msra.mxu0 0
    %389 = vmatprep.subr.bf16.mxu0 0
    %390 = vmatpush1.bf16.msra.mxu0 0
    %391 = vmatprep.subr.bf16.mxu0 0
    %392 = vmatpush1.bf16.msra.mxu0 0
    %393 = vmatprep.subr.bf16.mxu0 0
    %394 = vmatpush1.bf16.msra.mxu0 0
    %395 = vmatprep.subr.bf16.mxu0 0
    %396 = vmatpush1.bf16.msra.mxu0 0
    %397 = vmatprep.subr.bf16.mxu0 0
    %398 = vmatpush1.bf16.msra.mxu0 0
    %399 = vmatprep.subr.bf16.mxu0 0
    %400 = vmatpush1.bf16.msra.mxu0 0
    %401 = vmatprep.subr.bf16.mxu0 0
    %402 = vmatpush1.bf16.msra.mxu0 0
    %403 = vmatprep.subr.bf16.mxu0 0
    %404 = vmatpush1.bf16.msra.mxu0 0
    %405 = vmatprep.subr.bf16.mxu0 0
    %406 = vmatpush1.bf16.msra.mxu0 0
    %407 = vmatprep.subr.bf16.mxu0 0
    %408 = vmatpush1.bf16.msra.mxu0 0
    %409 = vmatprep.mubr.bf16.mxu0 0
    %410 = vmatmul.mubr.bf16.gmra.mrb[0].mxu0 %v372
    %v411 = vpop.f32.mrb[0].mxu0
    %v412 = vadd.f32 0.0, %v411
    %v413 = vpop.f32.mrb[0].mxu0
    %v414 = vpop.f32.mrb[0].mxu0
    %v415 = vpop.f32.mrb[0].mxu0
    %416 = vdwg.mxu0
    %v418 = vsel %vm267, %v314, 0
    %v421 = vsel %vm327, %v322, 0
    %423 = vmatprep.subr.bf16.mxu0 0
    %424 = vmatpush1.bf16.msra.mxu0 %v421
    %425 = vmatprep.subr.bf16.mxu0 0
    %426 = vmatpush1.bf16.msra.mxu0 0
    %427 = vmatprep.subr.bf16.mxu0 0
    %428 = vmatpush1.bf16.msra.mxu0 0
    %429 = vmatprep.subr.bf16.mxu0 0
    %430 = vmatpush1.bf16.msra.mxu0 0
    %431 = vmatprep.subr.bf16.mxu0 0
    %432 = vmatpush1.bf16.msra.mxu0 0
    %433 = vmatprep.subr.bf16.mxu0 0
    %434 = vmatpush1.bf16.msra.mxu0 0
    %435 = vmatprep.subr.bf16.mxu0 0
    %436 = vmatpush1.bf16.msra.mxu0 0
    %437 = vmatprep.subr.bf16.mxu0 0
    %438 = vmatpush1.bf16.msra.mxu0 0
    %439 = vmatprep.subr.bf16.mxu0 0
    %440 = vmatpush1.bf16.msra.mxu0 0
    %441 = vmatprep.subr.bf16.mxu0 0
    %442 = vmatpush1.bf16.msra.mxu0 0
    %443 = vmatprep.subr.bf16.mxu0 0
    %444 = vmatpush1.bf16.msra.mxu0 0
    %445 = vmatprep.subr.bf16.mxu0 0
    %446 = vmatpush1.bf16.msra.mxu0 0
    %447 = vmatprep.subr.bf16.mxu0 0
    %448 = vmatpush1.bf16.msra.mxu0 0
    %449 = vmatprep.subr.bf16.mxu0 0
    %450 = vmatpush1.bf16.msra.mxu0 0
    %451 = vmatprep.subr.bf16.mxu0 0
    %452 = vmatpush1.bf16.msra.mxu0 0
    %453 = vmatprep.subr.bf16.mxu0 0
    %454 = vmatpush1.bf16.msra.mxu0 0
    %455 = vmatprep.mubr.bf16.mxu0 0
    %456 = vmatmul.mubr.bf16.gmra.mrb[0].mxu0 %v418
    %v457 = vpop.f32.mrb[0].mxu0
    %v458 = vadd.f32 0.0, %v457
    %v459 = vpop.f32.mrb[0].mxu0
    %v460 = vpop.f32.mrb[0].mxu0
    %v461 = vpop.f32.mrb[0].mxu0
    %462 = vdwg.mxu0
    %v464 = vsel %vm267, %v315, 0
    %v467 = vsel %vm327, %v323, 0
    %469 = vmatprep.subr.bf16.mxu0 0
    %470 = vmatpush1.bf16.msra.mxu0 %v467
    %471 = vmatprep.subr.bf16.mxu0 0
    %472 = vmatpush1.bf16.msra.mxu0 0
    %473 = vmatprep.subr.bf16.mxu0 0
    %474 = vmatpush1.bf16.msra.mxu0 0
    %475 = vmatprep.subr.bf16.mxu0 0
    %476 = vmatpush1.bf16.msra.mxu0 0
    %477 = vmatprep.subr.bf16.mxu0 0
    %478 = vmatpush1.bf16.msra.mxu0 0
    %479 = vmatprep.subr.bf16.mxu0 0
    %480 = vmatpush1.bf16.msra.mxu0 0
    %481 = vmatprep.subr.bf16.mxu0 0
    %482 = vmatpush1.bf16.msra.mxu0 0
    %483 = vmatprep.subr.bf16.mxu0 0
    %484 = vmatpush1.bf16.msra.mxu0 0
    %485 = vmatprep.subr.bf16.mxu0 0
    %486 = vmatpush1.bf16.msra.mxu0 0
    %487 = vmatprep.subr.bf16.mxu0 0
    %488 = vmatpush1.bf16.msra.mxu0 0
    %489 = vmatprep.subr.bf16.mxu0 0
    %490 = vmatpush1.bf16.msra.mxu0 0
    %491 = vmatprep.subr.bf16.mxu0 0
    %492 = vmatpush1.bf16.msra.mxu0 0
    %493 = vmatprep.subr.bf16.mxu0 0
    %494 = vmatpush1.bf16.msra.mxu0 0
    %495 = vmatprep.subr.bf16.mxu0 0
    %496 = vmatpush1.bf16.msra.mxu0 0
    %497 = vmatprep.subr.bf16.mxu0 0
    %498 = vmatpush1.bf16.msra.mxu0 0
    %499 = vmatprep.subr.bf16.mxu0 0
    %500 = vmatpush1.bf16.msra.mxu0 0
    %501 = vmatprep.mubr.bf16.mxu0 0
    %502 = vmatmul.mubr.bf16.gmra.mrb[0].mxu0 %v464
    %v503 = vpop.f32.mrb[0].mxu0
    %v504 = vadd.f32 0.0, %v503
    %v505 = vpop.f32.mrb[0].mxu0
    %v506 = vpop.f32.mrb[0].mxu0
    %v507 = vpop.f32.mrb[0].mxu0
    %508 = vdwg.mxu0
    %509 = vst.msk [vmem:[#allocation8] sm:$0xff] %vm267, %v308
    %510 = vst.msk [vmem:[#allocation8 + $0x8] sm:$0xff] %vm267, %v309
    %511 = vst.msk [vmem:[#allocation8 + $0x10] sm:$0xff] %vm267, %v310
    %512 = vst.msk [vmem:[#allocation8 + $0x18] sm:$0xff] %vm267, %v311
    %513 = vst.msk [vmem:[#allocation7] sm:$0xff] %vm70, %v366
    %514 = vst.msk [vmem:[#allocation7 + $0x8] sm:$0xff] %vm70, %v412
    %515 = vst.msk [vmem:[#allocation7 + $0x10] sm:$0xff] %vm70, %v458
    %516 = vst.msk [vmem:[#allocation7 + $0x18] sm:$0xff] %vm70, %v504
    // Predicated region
    $region26: #{tpu_custom_call.1} parent=1 // pred_check
      _
    $region27: #{tpu_custom_call.1} parent=1 // pred_check_branch
      %518 = sbr.rel (0) target = $region29
    $region28: #{tpu_custom_call.1} parent=1 // pred_region
      %s520 = ssub.s32 512, 512
      %521 = vsyncadd [#allocation4], %s520
      %s522 = sshll.u32 [#allocation7], 4
      %s523 = int_to_ptr.vmem [resolvable:$true] %s522
      %528 = dma.vmem_to_hbm [thread:$0]  %s523, 512, %s4, [#allocation4], 128, 128, 8
    $region29: #{tpu_custom_call.1} parent=1 // pred_fallthru
      _
    // Predicated region
    $region30: #{tpu_custom_call.1} parent=1 // pred_check
      _
    $region31: #{tpu_custom_call.1} parent=1 // pred_check_branch
      %530 = sbr.rel (0) target = $region33
    $region32: #{tpu_custom_call.1} parent=1 // pred_region
      %s532 = ssub.s32 512, 512
      %533 = vsyncadd [#allocation9], %s532
      %s534 = sshll.u32 [#allocation8], 4
      %s535 = int_to_ptr.vmem [resolvable:$true] %s534
      %540 = dma.vmem_to_hbm [thread:$0]  %s535, 512, %s5, [#allocation9], 128, 128, 8
    $region33: #{tpu_custom_call.1} parent=1 // pred_fallthru
      _
    // Predicated region
    $region34: #{tpu_custom_call.1} parent=1 // pred_check
      _
    $region35: #{tpu_custom_call.1} parent=1 // pred_check_branch
      %542 = sbr.rel (0) target = $region37
    $region36: #{tpu_custom_call.1} parent=1 // pred_region
      %543 = dma.done [#allocation4], 512
    $region37: #{tpu_custom_call.1} parent=1 // pred_fallthru
      _
    // Predicated region
    $region38: #{tpu_custom_call.1} parent=1 // pred_check
      _
    $region39: #{tpu_custom_call.1} parent=1 // pred_check_branch
      %545 = sbr.rel (0) target = $region41
    $region40: #{tpu_custom_call.1} parent=1 // pred_region
      %546 = dma.done [#allocation9], 512
    $region41: #{tpu_custom_call.1} parent=1 // pred_fallthru
      _
    %547 = vsyncpa [#allocation3], 1
    %548 = vsyncpa [#allocation6], 1
    %549 = vsyncpa [#allocation4], 1
    %550 = vsyncpa [#allocation9], 1

// kernel: tpu_custom_call.1
$region0: #{tpu_custom_call.1}
  #allocation0 [shape = 'u32[]', space=smem, size = 0x4, offset = 0x4, fixed_abs, tag = 'smem constant byte address 0x4 - core index']
  #allocation1 [shape = 'u32[144,128]{1,0:T(1,128)}', space=vmem, size = 0x12000, scoped, tag = 'internal scratch']
  %s0 = inlined_call_operand.hbm [shape: f32[4,8,32], index: 0, kind: input, shape index: {}]
  %s1 = inlined_call_operand.hbm [shape: f32[4,8,32], index: 1, kind: input, shape index: {}]
  %s2 = inlined_call_operand.hbm [shape: f32[4,8,32], index: 2, kind: input, shape index: {}]
  %s3 = inlined_call_operand.vmem [shape: s8[4,8,8], index: 3, kind: input, shape index: {}]
  %s4 = inlined_call_operand.hbm [shape: f32[4,8,32], index: 4, kind: output, shape index: {0}]
  %s5 = inlined_call_operand.hbm [shape: f32[4,8,8], index: 5, kind: output, shape index: {1}]
  %6 = xla_tuple %s4, %s5
  %s7 = sld [smem:[#allocation0]]
  $region46: #{tpu_custom_call.1} parent=0
    _
  %s9 = ssub.s32 1, %s7
  %s10 = scalar_select 0, %s9, %s7
  $region1: #{tpu_custom_call.1} parent=0
    #allocation2 [shape = 'u8[16384]{0}', space=vmem, size = 0x4000, scoped, tag = 'input window, operand 0, single buffered']
    #allocation3 [shape = 's32[1]{0}', space=sflag, size = 0x4, scoped, tag = 'scoped memory for tpu_custom_call.1']
    #allocation4 [shape = 's32[1]{0}', space=sflag, size = 0x4, scoped, tag = 'scoped memory for tpu_custom_call.1']
    #allocation5 [shape = 'u8[16384]{0}', space=vmem, size = 0x4000, scoped, tag = 'input window, operand 1, single buffered']
    #allocation6 [shape = 's32[1]{0}', space=sflag, size = 0x4, scoped, tag = 'scoped memory for tpu_custom_call.1']
    #allocation7 [shape = 'u8[16384]{0}', space=vmem, size = 0x4000, scoped, tag = 'input window, operand 2, single buffered']
    #allocation8 [shape = 'u8[16384]{0}', space=vmem, size = 0x4000, scoped, tag = 'output window, operand 0, single buffered']
    #allocation9 [shape = 'u8[16384]{0}', space=vmem, size = 0x4000, scoped, tag = 'output window, operand 1, single buffered']
    #allocation10 [shape = 's32[1]{0}', space=sflag, size = 0x4, scoped, tag = 'scoped memory for tpu_custom_call.1']
    %11 = vsyncpa [#allocation3], 0
    %12 = vsyncpa [#allocation6], 0
    %13 = vsyncpa [#allocation4], 0
    %14 = vsyncpa [#allocation10], 0
    // Predicated region
    $region2: #{tpu_custom_call.1} parent=1 // pred_check
      _
    $region3: #{tpu_custom_call.1} parent=1 // pred_check_branch
      %16 = sbr.rel (0) target = $region5
    $region4: #{tpu_custom_call.1} parent=1 // pred_region
      %s18 = ssub.s32 512, 512
      %19 = vsyncadd [#allocation3], %s18
      %s20 = sshll.u32 [#allocation2], 4
      %s21 = int_to_ptr.vmem [resolvable:$true] %s20
      %26 = dma.hbm_to_vmem [thread:$0]  %s0, 512, %s21, [#allocation3], 128, 128, 8
    $region5: #{tpu_custom_call.1} parent=1 // pred_fallthru
      _
    // Predicated region
    $region6: #{tpu_custom_call.1} parent=1 // pred_check
      _
    $region7: #{tpu_custom_call.1} parent=1 // pred_check_branch
      %28 = sbr.rel (0) target = $region9
    $region8: #{tpu_custom_call.1} parent=1 // pred_region
      %s30 = ssub.s32 512, 512
      %31 = vsyncadd [#allocation6], %s30
      %s32 = sshll.u32 [#allocation5], 4
      %s33 = int_to_ptr.vmem [resolvable:$true] %s32
      %38 = dma.hbm_to_vmem [thread:$0]  %s1, 512, %s33, [#allocation6], 128, 128, 8
    $region9: #{tpu_custom_call.1} parent=1 // pred_fallthru
      _
    // Predicated region
    $region10: #{tpu_custom_call.1} parent=1 // pred_check
      _
    $region11: #{tpu_custom_call.1} parent=1 // pred_check_branch
      %40 = sbr.rel (0) target = $region13
    $region12: #{tpu_custom_call.1} parent=1 // pred_region
      %s42 = ssub.s32 512, 512
      %43 = vsyncadd [#allocation6], %s42
      %s44 = sshll.u32 [#allocation7], 4
      %s45 = int_to_ptr.vmem [resolvable:$true] %s44
      %50 = dma.hbm_to_vmem [thread:$0]  %s2, 512, %s45, [#allocation6], 128, 128, 8
    $region13: #{tpu_custom_call.1} parent=1 // pred_fallthru
      _
    // Predicated region
    $region14: #{tpu_custom_call.1} parent=1 // pred_check
      _
    $region15: #{tpu_custom_call.1} parent=1 // pred_check_branch
      %52 = sbr.rel (0) target = $region17
    $region16: #{tpu_custom_call.1} parent=1 // pred_region
      _
    $region17: #{tpu_custom_call.1} parent=1 // pred_fallthru
      _
    // Predicated region
    $region18: #{tpu_custom_call.1} parent=1 // pred_check
      _
    $region19: #{tpu_custom_call.1} parent=1 // pred_check_branch
      %54 = sbr.rel (0) target = $region21
    $region20: #{tpu_custom_call.1} parent=1 // pred_region
      %55 = dma.done [#allocation3], 512
    $region21: #{tpu_custom_call.1} parent=1 // pred_fallthru
      _
    // Predicated region
    $region22: #{tpu_custom_call.1} parent=1 // pred_check
      _
    $region23: #{tpu_custom_call.1} parent=1 // pred_check_branch
      %57 = sbr.rel (0) target = $region25
    $region24: #{tpu_custom_call.1} parent=1 // pred_region
      %58 = dma.done [#allocation6], 512
    $region25: #{tpu_custom_call.1} parent=1 // pred_fallthru
      _
    // Predicated region
    $region26: #{tpu_custom_call.1} parent=1 // pred_check
      _
    $region27: #{tpu_custom_call.1} parent=1 // pred_check_branch
      %60 = sbr.rel (0) target = $region29
    $region28: #{tpu_custom_call.1} parent=1 // pred_region
      %61 = dma.done [#allocation6], 512
    $region29: #{tpu_custom_call.1} parent=1 // pred_fallthru
      _
    %v65 = vld [vmem:[#allocation2] sm:$0xff]
    %v66 = vld [vmem:[#allocation2 + $0x8] sm:$0xff]
    %v67 = vld [vmem:[#allocation2 + $0x10] sm:$0xff]
    %v68 = vld [vmem:[#allocation2 + $0x18] sm:$0xff]
    %v69 = vmul.f32 %v65, 0.17677669
    %v70 = vmul.f32 %v66, 0.17677669
    %v71 = vmul.f32 %v67, 0.17677669
    %v72 = vmul.f32 %v68, 0.17677669
    %v73 = vpack.c.bf16 %v69, %v69
    %v74 = vpack.c.bf16 %v70, %v70
    %v75 = vpack.c.bf16 %v71, %v71
    %v76 = vpack.c.bf16 %v72, %v72
    %v77 = vld [vmem:[#allocation5] sm:$0xff]
    %v78 = vld [vmem:[#allocation5 + $0x8] sm:$0xff]
    %v79 = vld [vmem:[#allocation5 + $0x10] sm:$0xff]
    %v80 = vld [vmem:[#allocation5 + $0x18] sm:$0xff]
    %v81 = vpack.c.bf16 %v77, %v77
    %v82 = vpack.c.bf16 %v78, %v78
    %v83 = vpack.c.bf16 %v79, %v79
    %v84 = vpack.c.bf16 %v80, %v80
    %vm85 = vcmask 261120
    %v87 = vsel %vm85, %v73, 0
    %v90 = vsel %vm85, %v81, 0
    %92 = vmatprep.subr.bf16.mxu0 0
    %93 = vmatpush1.bf16.xpose.msra.mxu0 %v90
    %94 = vmatprep.subr.bf16.mxu0 0
    %95 = vmatpush1.bf16.xpose.msra.mxu0 0
    %96 = vmatprep.subr.bf16.mxu0 0
    %97 = vmatpush1.bf16.xpose.msra.mxu0 0
    %98 = vmatprep.subr.bf16.mxu0 0
    %99 = vmatpush1.bf16.xpose.msra.mxu0 0
    %100 = vmatprep.subr.bf16.mxu0 0
    %101 = vmatpush1.bf16.xpose.msra.mxu0 0
    %102 = vmatprep.subr.bf16.mxu0 0
    %103 = vmatpush1.bf16.xpose.msra.mxu0 0
    %104 = vmatprep.subr.bf16.mxu0 0
    %105 = vmatpush1.bf16.xpose.msra.mxu0 0
    %106 = vmatprep.subr.bf16.mxu0 0
    %107 = vmatpush1.bf16.xpose.msra.mxu0 0
    %108 = vmatprep.subr.bf16.mxu0 0
    %109 = vmatpush1.bf16.xpose.msra.mxu0 0
    %110 = vmatprep.subr.bf16.mxu0 0
    %111 = vmatpush1.bf16.xpose.msra.mxu0 0
    %112 = vmatprep.subr.bf16.mxu0 0
    %113 = vmatpush1.bf16.xpose.msra.mxu0 0
    %114 = vmatprep.subr.bf16.mxu0 0
    %115 = vmatpush1.bf16.xpose.msra.mxu0 0
    %116 = vmatprep.subr.bf16.mxu0 0
    %117 = vmatpush1.bf16.xpose.msra.mxu0 0
    %118 = vmatprep.subr.bf16.mxu0 0
    %119 = vmatpush1.bf16.xpose.msra.mxu0 0
    %120 = vmatprep.subr.bf16.mxu0 0
    %121 = vmatpush1.bf16.xpose.msra.mxu0 0
    %122 = vmatprep.subr.bf16.mxu0 0
    %123 = vmatpush1.bf16.xpose.msra.mxu0 0
    %124 = vmatprep.mubr.bf16.mxu0 0
    %125 = vmatmul.mubr.bf16.gmra.mrb[0].mxu0 %v87
    %v126 = vpop.f32.mrb[0].mxu0
    %v127 = vadd.f32 0.0, %v126
    %v128 = vpop.f32.mrb[0].mxu0
    %v129 = vpop.f32.mrb[0].mxu0
    %v130 = vpop.f32.mrb[0].mxu0
    %131 = vdwg.mxu0
    %v133 = vsel %vm85, %v74, 0
    %v136 = vsel %vm85, %v82, 0
    %138 = vmatprep.subr.bf16.mxu0 0
    %139 = vmatpush1.bf16.xpose.msra.mxu0 %v136
    %140 = vmatprep.subr.bf16.mxu0 0
    %141 = vmatpush1.bf16.xpose.msra.mxu0 0
    %142 = vmatprep.subr.bf16.mxu0 0
    %143 = vmatpush1.bf16.xpose.msra.mxu0 0
    %144 = vmatprep.subr.bf16.mxu0 0
    %145 = vmatpush1.bf16.xpose.msra.mxu0 0
    %146 = vmatprep.subr.bf16.mxu0 0
    %147 = vmatpush1.bf16.xpose.msra.mxu0 0
    %148 = vmatprep.subr.bf16.mxu0 0
    %149 = vmatpush1.bf16.xpose.msra.mxu0 0
    %150 = vmatprep.subr.bf16.mxu0 0
    %151 = vmatpush1.bf16.xpose.msra.mxu0 0
    %152 = vmatprep.subr.bf16.mxu0 0
    %153 = vmatpush1.bf16.xpose.msra.mxu0 0
    %154 = vmatprep.subr.bf16.mxu0 0
    %155 = vmatpush1.bf16.xpose.msra.mxu0 0
    %156 = vmatprep.subr.bf16.mxu0 0
    %157 = vmatpush1.bf16.xpose.msra.mxu0 0
    %158 = vmatprep.subr.bf16.mxu0 0
    %159 = vmatpush1.bf16.xpose.msra.mxu0 0
    %160 = vmatprep.subr.bf16.mxu0 0
    %161 = vmatpush1.bf16.xpose.msra.mxu0 0
    %162 = vmatprep.subr.bf16.mxu0 0
    %163 = vmatpush1.bf16.xpose.msra.mxu0 0
    %164 = vmatprep.subr.bf16.mxu0 0
    %165 = vmatpush1.bf16.xpose.msra.mxu0 0
    %166 = vmatprep.subr.bf16.mxu0 0
    %167 = vmatpush1.bf16.xpose.msra.mxu0 0
    %168 = vmatprep.subr.bf16.mxu0 0
    %169 = vmatpush1.bf16.xpose.msra.mxu0 0
    %170 = vmatprep.mubr.bf16.mxu0 0
    %171 = vmatmul.mubr.bf16.gmra.mrb[0].mxu0 %v133
    %v172 = vpop.f32.mrb[0].mxu0
    %v173 = vadd.f32 0.0, %v172
    %v174 = vpop.f32.mrb[0].mxu0
    %v175 = vpop.f32.mrb[0].mxu0
    %v176 = vpop.f32.mrb[0].mxu0
    %177 = vdwg.mxu0
    %v179 = vsel %vm85, %v75, 0
    %v182 = vsel %vm85, %v83, 0
    %184 = vmatprep.subr.bf16.mxu0 0
    %185 = vmatpush1.bf16.xpose.msra.mxu0 %v182
    %186 = vmatprep.subr.bf16.mxu0 0
    %187 = vmatpush1.bf16.xpose.msra.mxu0 0
    %188 = vmatprep.subr.bf16.mxu0 0
    %189 = vmatpush1.bf16.xpose.msra.mxu0 0
    %190 = vmatprep.subr.bf16.mxu0 0
    %191 = vmatpush1.bf16.xpose.msra.mxu0 0
    %192 = vmatprep.subr.bf16.mxu0 0
    %193 = vmatpush1.bf16.xpose.msra.mxu0 0
    %194 = vmatprep.subr.bf16.mxu0 0
    %195 = vmatpush1.bf16.xpose.msra.mxu0 0
    %196 = vmatprep.subr.bf16.mxu0 0
    %197 = vmatpush1.bf16.xpose.msra.mxu0 0
    %198 = vmatprep.subr.bf16.mxu0 0
    %199 = vmatpush1.bf16.xpose.msra.mxu0 0
    %200 = vmatprep.subr.bf16.mxu0 0
    %201 = vmatpush1.bf16.xpose.msra.mxu0 0
    %202 = vmatprep.subr.bf16.mxu0 0
    %203 = vmatpush1.bf16.xpose.msra.mxu0 0
    %204 = vmatprep.subr.bf16.mxu0 0
    %205 = vmatpush1.bf16.xpose.msra.mxu0 0
    %206 = vmatprep.subr.bf16.mxu0 0
    %207 = vmatpush1.bf16.xpose.msra.mxu0 0
    %208 = vmatprep.subr.bf16.mxu0 0
    %209 = vmatpush1.bf16.xpose.msra.mxu0 0
    %210 = vmatprep.subr.bf16.mxu0 0
    %211 = vmatpush1.bf16.xpose.msra.mxu0 0
    %212 = vmatprep.subr.bf16.mxu0 0
    %213 = vmatpush1.bf16.xpose.msra.mxu0 0
    %214 = vmatprep.subr.bf16.mxu0 0
    %215 = vmatpush1.bf16.xpose.msra.mxu0 0
    %216 = vmatprep.mubr.bf16.mxu0 0
    %217 = vmatmul.mubr.bf16.gmra.mrb[0].mxu0 %v179
    %v218 = vpop.f32.mrb[0].mxu0
    %v219 = vadd.f32 0.0, %v218
    %v220 = vpop.f32.mrb[0].mxu0
    %v221 = vpop.f32.mrb[0].mxu0
    %v222 = vpop.f32.mrb[0].mxu0
    %223 = vdwg.mxu0
    %v225 = vsel %vm85, %v76, 0
    %v228 = vsel %vm85, %v84, 0
    %230 = vmatprep.subr.bf16.mxu0 0
    %231 = vmatpush1.bf16.xpose.msra.mxu0 %v228
    %232 = vmatprep.subr.bf16.mxu0 0
    %233 = vmatpush1.bf16.xpose.msra.mxu0 0
    %234 = vmatprep.subr.bf16.mxu0 0
    %235 = vmatpush1.bf16.xpose.msra.mxu0 0
    %236 = vmatprep.subr.bf16.mxu0 0
    %237 = vmatpush1.bf16.xpose.msra.mxu0 0
    %238 = vmatprep.subr.bf16.mxu0 0
    %239 = vmatpush1.bf16.xpose.msra.mxu0 0
    %240 = vmatprep.subr.bf16.mxu0 0
    %241 = vmatpush1.bf16.xpose.msra.mxu0 0
    %242 = vmatprep.subr.bf16.mxu0 0
    %243 = vmatpush1.bf16.xpose.msra.mxu0 0
    %244 = vmatprep.subr.bf16.mxu0 0
    %245 = vmatpush1.bf16.xpose.msra.mxu0 0
    %246 = vmatprep.subr.bf16.mxu0 0
    %247 = vmatpush1.bf16.xpose.msra.mxu0 0
    %248 = vmatprep.subr.bf16.mxu0 0
    %249 = vmatpush1.bf16.xpose.msra.mxu0 0
    %250 = vmatprep.subr.bf16.mxu0 0
    %251 = vmatpush1.bf16.xpose.msra.mxu0 0
    %252 = vmatprep.subr.bf16.mxu0 0
    %253 = vmatpush1.bf16.xpose.msra.mxu0 0
    %254 = vmatprep.subr.bf16.mxu0 0
    %255 = vmatpush1.bf16.xpose.msra.mxu0 0
    %256 = vmatprep.subr.bf16.mxu0 0
    %257 = vmatpush1.bf16.xpose.msra.mxu0 0
    %258 = vmatprep.subr.bf16.mxu0 0
    %259 = vmatpush1.bf16.xpose.msra.mxu0 0
    %260 = vmatprep.subr.bf16.mxu0 0
    %261 = vmatpush1.bf16.xpose.msra.mxu0 0
    %262 = vmatprep.mubr.bf16.mxu0 0
    %263 = vmatmul.mubr.bf16.gmra.mrb[0].mxu0 %v225
    %v264 = vpop.f32.mrb[0].mxu0
    %v265 = vadd.f32 0.0, %v264
    %v266 = vpop.f32.mrb[0].mxu0
    %v267 = vpop.f32.mrb[0].mxu0
    %v268 = vpop.f32.mrb[0].mxu0
    %269 = vdwg.mxu0
    %v270 = vld [vmem:[%s3] sm:$0x3]
    %v271 = vld [vmem:[%s3 + $0x2] sm:$0x3]
    %v272 = vld [vmem:[%s3 + $0x4] sm:$0x3]
    %v273 = vld [vmem:[%s3 + $0x6] sm:$0x3]
    %vm274 = vnez %v270
    %vm275 = vnez %v271
    %vm276 = vnez %v272
    %vm277 = vnez %v273
    %v278 = vsel %vm274, 16843009, 0
    %v279 = vsel %vm275, 16843009, 0
    %v280 = vsel %vm276, 16843009, 0
    %v281 = vsel %vm277, 16843009, 0
    %v282 = vunpack.c.0.s8 %v278
    %v283 = vunpack.c.0.s8 %v279
    %v284 = vunpack.c.0.s8 %v280
    %v285 = vunpack.c.0.s8 %v281
    %vm286 = vcmp.ne.s32.totalorder %v282, 0
    %vm287 = vcmp.ne.s32.totalorder %v283, 0
    %vm288 = vcmp.ne.s32.totalorder %v284, 0
    %vm289 = vcmp.ne.s32.totalorder %v285, 0
    %v290 = vsel %vm286, -1e+09, %v127
    %v291 = vsel %vm287, -1e+09, %v173
    %v292 = vsel %vm288, -1e+09, %v219
    %v293 = vsel %vm289, -1e+09, %v265
    %vm294 = vcmask 64512
    %v295 = vsel %vm294, %v290, -inf
    %296 = vmax.xlane.f32.xlu0 %v295
    %v297 = vpop.xlane.xlu0 %296
    %v298 = vsel %vm294, %v291, -inf
    %299 = vmax.xlane.f32.xlu0 %v298
    %v300 = vpop.xlane.xlu0 %299
    %v301 = vsel %vm294, %v292, -inf
    %302 = vmax.xlane.f32.xlu0 %v301
    %v303 = vpop.xlane.xlu0 %302
    %v304 = vsel %vm294, %v293, -inf
    %305 = vmax.xlane.f32.xlu0 %v304
    %v306 = vpop.xlane.xlu0 %305
    %v307 = vsub.f32 %v290, %v297
    %v308 = vsub.f32 %v291, %v300
    %v309 = vsub.f32 %v292, %v303
    %v310 = vsub.f32 %v293, %v306
    %v311 = vmul.f32 %v307, 1.442695
    %v312 = vpow.pop %v311
    %v313 = vmul.f32 %v308, 1.442695
    %v314 = vpow.pop %v313
    %v315 = vmul.f32 %v309, 1.442695
    %v316 = vpow.pop %v315
    %v317 = vmul.f32 %v310, 1.442695
    %v318 = vpow.pop %v317
    %v319 = vsel %vm294, %v312, 0.0
    %320 = vadd.xlane.f32.xlu0 %v319
    %v321 = vpop.xlane.xlu0 %320
    %v322 = vsel %vm294, %v314, 0.0
    %323 = vadd.xlane.f32.xlu0 %v322
    %v324 = vpop.xlane.xlu0 %323
    %v325 = vsel %vm294, %v316, 0.0
    %326 = vadd.xlane.f32.xlu0 %v325
    %v327 = vpop.xlane.xlu0 %326
    %v328 = vsel %vm294, %v318, 0.0
    %329 = vadd.xlane.f32.xlu0 %v328
    %v330 = vpop.xlane.xlu0 %329
    %v331 = vrcp.pop %v321
    %v332 = vrcp.pop %v324
    %v333 = vrcp.pop %v327
    %v334 = vrcp.pop %v330
    %v335 = vmul.f32 %v312, %v331
    %v336 = vmul.f32 %v314, %v332
    %v337 = vmul.f32 %v316, %v333
    %v338 = vmul.f32 %v318, %v334
    %v339 = vpack.c.bf16 %v335, %v335
    %v340 = vpack.c.bf16 %v336, %v336
    %v341 = vpack.c.bf16 %v337, %v337
    %v342 = vpack.c.bf16 %v338, %v338
    %v343 = vld [vmem:[#allocation7] sm:$0xff]
    %v344 = vld [vmem:[#allocation7 + $0x8] sm:$0xff]
    %v345 = vld [vmem:[#allocation7 + $0x10] sm:$0xff]
    %v346 = vld [vmem:[#allocation7 + $0x18] sm:$0xff]
    %v347 = vpack.c.bf16 %v343, %v343
    %v348 = vpack.c.bf16 %v344, %v344
    %v349 = vpack.c.bf16 %v345, %v345
    %v350 = vpack.c.bf16 %v346, %v346
    %v352 = vsel %vm294, %v339, 0
    %vm354 = vcmask 1043456
    %v356 = vsel %vm354, %v347, 0
    %358 = vmatprep.subr.bf16.mxu0 0
    %359 = vmatpush1.bf16.msra.mxu0 %v356
    %360 = vmatprep.subr.bf16.mxu0 0
    %361 = vmatpush1.bf16.msra.mxu0 0
    %362 = vmatprep.subr.bf16.mxu0 0
    %363 = vmatpush1.bf16.msra.mxu0 0
    %364 = vmatprep.subr.bf16.mxu0 0
    %365 = vmatpush1.bf16.msra.mxu0 0
    %366 = vmatprep.subr.bf16.mxu0 0
    %367 = vmatpush1.bf16.msra.mxu0 0
    %368 = vmatprep.subr.bf16.mxu0 0
    %369 = vmatpush1.bf16.msra.mxu0 0
    %370 = vmatprep.subr.bf16.mxu0 0
    %371 = vmatpush1.bf16.msra.mxu0 0
    %372 = vmatprep.subr.bf16.mxu0 0
    %373 = vmatpush1.bf16.msra.mxu0 0
    %374 = vmatprep.subr.bf16.mxu0 0
    %375 = vmatpush1.bf16.msra.mxu0 0
    %376 = vmatprep.subr.bf16.mxu0 0
    %377 = vmatpush1.bf16.msra.mxu0 0
    %378 = vmatprep.subr.bf16.mxu0 0
    %379 = vmatpush1.bf16.msra.mxu0 0
    %380 = vmatprep.subr.bf16.mxu0 0
    %381 = vmatpush1.bf16.msra.mxu0 0
    %382 = vmatprep.subr.bf16.mxu0 0
    %383 = vmatpush1.bf16.msra.mxu0 0
    %384 = vmatprep.subr.bf16.mxu0 0
    %385 = vmatpush1.bf16.msra.mxu0 0
    %386 = vmatprep.subr.bf16.mxu0 0
    %387 = vmatpush1.bf16.msra.mxu0 0
    %388 = vmatprep.subr.bf16.mxu0 0
    %389 = vmatpush1.bf16.msra.mxu0 0
    %390 = vmatprep.mubr.bf16.mxu0 0
    %391 = vmatmul.mubr.bf16.gmra.mrb[0].mxu0 %v352
    %v392 = vpop.f32.mrb[0].mxu0
    %v393 = vadd.f32 0.0, %v392
    %v394 = vpop.f32.mrb[0].mxu0
    %v395 = vpop.f32.mrb[0].mxu0
    %v396 = vpop.f32.mrb[0].mxu0
    %397 = vdwg.mxu0
    %v399 = vsel %vm294, %v340, 0
    %v402 = vsel %vm354, %v348, 0
    %404 = vmatprep.subr.bf16.mxu0 0
    %405 = vmatpush1.bf16.msra.mxu0 %v402
    %406 = vmatprep.subr.bf16.mxu0 0
    %407 = vmatpush1.bf16.msra.mxu0 0
    %408 = vmatprep.subr.bf16.mxu0 0
    %409 = vmatpush1.bf16.msra.mxu0 0
    %410 = vmatprep.subr.bf16.mxu0 0
    %411 = vmatpush1.bf16.msra.mxu0 0
    %412 = vmatprep.subr.bf16.mxu0 0
    %413 = vmatpush1.bf16.msra.mxu0 0
    %414 = vmatprep.subr.bf16.mxu0 0
    %415 = vmatpush1.bf16.msra.mxu0 0
    %416 = vmatprep.subr.bf16.mxu0 0
    %417 = vmatpush1.bf16.msra.mxu0 0
    %418 = vmatprep.subr.bf16.mxu0 0
    %419 = vmatpush1.bf16.msra.mxu0 0
    %420 = vmatprep.subr.bf16.mxu0 0
    %421 = vmatpush1.bf16.msra.mxu0 0
    %422 = vmatprep.subr.bf16.mxu0 0
    %423 = vmatpush1.bf16.msra.mxu0 0
    %424 = vmatprep.subr.bf16.mxu0 0
    %425 = vmatpush1.bf16.msra.mxu0 0
    %426 = vmatprep.subr.bf16.mxu0 0
    %427 = vmatpush1.bf16.msra.mxu0 0
    %428 = vmatprep.subr.bf16.mxu0 0
    %429 = vmatpush1.bf16.msra.mxu0 0
    %430 = vmatprep.subr.bf16.mxu0 0
    %431 = vmatpush1.bf16.msra.mxu0 0
    %432 = vmatprep.subr.bf16.mxu0 0
    %433 = vmatpush1.bf16.msra.mxu0 0
    %434 = vmatprep.subr.bf16.mxu0 0
    %435 = vmatpush1.bf16.msra.mxu0 0
    %436 = vmatprep.mubr.bf16.mxu0 0
    %437 = vmatmul.mubr.bf16.gmra.mrb[0].mxu0 %v399
    %v438 = vpop.f32.mrb[0].mxu0
    %v439 = vadd.f32 0.0, %v438
    %v440 = vpop.f32.mrb[0].mxu0
    %v441 = vpop.f32.mrb[0].mxu0
    %v442 = vpop.f32.mrb[0].mxu0
    %443 = vdwg.mxu0
    %v445 = vsel %vm294, %v341, 0
    %v448 = vsel %vm354, %v349, 0
    %450 = vmatprep.subr.bf16.mxu0 0
    %451 = vmatpush1.bf16.msra.mxu0 %v448
    %452 = vmatprep.subr.bf16.mxu0 0
    %453 = vmatpush1.bf16.msra.mxu0 0
    %454 = vmatprep.subr.bf16.mxu0 0
    %455 = vmatpush1.bf16.msra.mxu0 0
    %456 = vmatprep.subr.bf16.mxu0 0
    %457 = vmatpush1.bf16.msra.mxu0 0
    %458 = vmatprep.subr.bf16.mxu0 0
    %459 = vmatpush1.bf16.msra.mxu0 0
    %460 = vmatprep.subr.bf16.mxu0 0
    %461 = vmatpush1.bf16.msra.mxu0 0
    %462 = vmatprep.subr.bf16.mxu0 0
    %463 = vmatpush1.bf16.msra.mxu0 0
    %464 = vmatprep.subr.bf16.mxu0 0
    %465 = vmatpush1.bf16.msra.mxu0 0
    %466 = vmatprep.subr.bf16.mxu0 0
    %467 = vmatpush1.bf16.msra.mxu0 0
    %468 = vmatprep.subr.bf16.mxu0 0
    %469 = vmatpush1.bf16.msra.mxu0 0
    %470 = vmatprep.subr.bf16.mxu0 0
    %471 = vmatpush1.bf16.msra.mxu0 0
    %472 = vmatprep.subr.bf16.mxu0 0
    %473 = vmatpush1.bf16.msra.mxu0 0
    %474 = vmatprep.subr.bf16.mxu0 0
    %475 = vmatpush1.bf16.msra.mxu0 0
    %476 = vmatprep.subr.bf16.mxu0 0
    %477 = vmatpush1.bf16.msra.mxu0 0
    %478 = vmatprep.subr.bf16.mxu0 0
    %479 = vmatpush1.bf16.msra.mxu0 0
    %480 = vmatprep.subr.bf16.mxu0 0
    %481 = vmatpush1.bf16.msra.mxu0 0
    %482 = vmatprep.mubr.bf16.mxu0 0
    %483 = vmatmul.mubr.bf16.gmra.mrb[0].mxu0 %v445
    %v484 = vpop.f32.mrb[0].mxu0
    %v485 = vadd.f32 0.0, %v484
    %v486 = vpop.f32.mrb[0].mxu0
    %v487 = vpop.f32.mrb[0].mxu0
    %v488 = vpop.f32.mrb[0].mxu0
    %489 = vdwg.mxu0
    %v491 = vsel %vm294, %v342, 0
    %v494 = vsel %vm354, %v350, 0
    %496 = vmatprep.subr.bf16.mxu0 0
    %497 = vmatpush1.bf16.msra.mxu0 %v494
    %498 = vmatprep.subr.bf16.mxu0 0
    %499 = vmatpush1.bf16.msra.mxu0 0
    %500 = vmatprep.subr.bf16.mxu0 0
    %501 = vmatpush1.bf16.msra.mxu0 0
    %502 = vmatprep.subr.bf16.mxu0 0
    %503 = vmatpush1.bf16.msra.mxu0 0
    %504 = vmatprep.subr.bf16.mxu0 0
    %505 = vmatpush1.bf16.msra.mxu0 0
    %506 = vmatprep.subr.bf16.mxu0 0
    %507 = vmatpush1.bf16.msra.mxu0 0
    %508 = vmatprep.subr.bf16.mxu0 0
    %509 = vmatpush1.bf16.msra.mxu0 0
    %510 = vmatprep.subr.bf16.mxu0 0
    %511 = vmatpush1.bf16.msra.mxu0 0
    %512 = vmatprep.subr.bf16.mxu0 0
    %513 = vmatpush1.bf16.msra.mxu0 0
    %514 = vmatprep.subr.bf16.mxu0 0
    %515 = vmatpush1.bf16.msra.mxu0 0
    %516 = vmatprep.subr.bf16.mxu0 0
    %517 = vmatpush1.bf16.msra.mxu0 0
    %518 = vmatprep.subr.bf16.mxu0 0
    %519 = vmatpush1.bf16.msra.mxu0 0
    %520 = vmatprep.subr.bf16.mxu0 0
    %521 = vmatpush1.bf16.msra.mxu0 0
    %522 = vmatprep.subr.bf16.mxu0 0
    %523 = vmatpush1.bf16.msra.mxu0 0
    %524 = vmatprep.subr.bf16.mxu0 0
    %525 = vmatpush1.bf16.msra.mxu0 0
    %526 = vmatprep.subr.bf16.mxu0 0
    %527 = vmatpush1.bf16.msra.mxu0 0
    %528 = vmatprep.mubr.bf16.mxu0 0
    %529 = vmatmul.mubr.bf16.gmra.mrb[0].mxu0 %v491
    %v530 = vpop.f32.mrb[0].mxu0
    %v531 = vadd.f32 0.0, %v530
    %v532 = vpop.f32.mrb[0].mxu0
    %v533 = vpop.f32.mrb[0].mxu0
    %v534 = vpop.f32.mrb[0].mxu0
    %535 = vdwg.mxu0
    %536 = vst.msk [vmem:[#allocation9] sm:$0xff] %vm294, %v335
    %537 = vst.msk [vmem:[#allocation9 + $0x8] sm:$0xff] %vm294, %v336
    %538 = vst.msk [vmem:[#allocation9 + $0x10] sm:$0xff] %vm294, %v337
    %539 = vst.msk [vmem:[#allocation9 + $0x18] sm:$0xff] %vm294, %v338
    %540 = vst.msk [vmem:[#allocation8] sm:$0xff] %vm85, %v393
    %541 = vst.msk [vmem:[#allocation8 + $0x8] sm:$0xff] %vm85, %v439
    %542 = vst.msk [vmem:[#allocation8 + $0x10] sm:$0xff] %vm85, %v485
    %543 = vst.msk [vmem:[#allocation8 + $0x18] sm:$0xff] %vm85, %v531
    // Predicated region
    $region30: #{tpu_custom_call.1} parent=1 // pred_check
      _
    $region31: #{tpu_custom_call.1} parent=1 // pred_check_branch
      %545 = sbr.rel (0) target = $region33
    $region32: #{tpu_custom_call.1} parent=1 // pred_region
      %s547 = ssub.s32 512, 512
      %548 = vsyncadd [#allocation4], %s547
      %s549 = sshll.u32 [#allocation8], 4
      %s550 = int_to_ptr.vmem [resolvable:$true] %s549
      %555 = dma.vmem_to_hbm [thread:$0]  %s550, 512, %s4, [#allocation4], 128, 128, 8
    $region33: #{tpu_custom_call.1} parent=1 // pred_fallthru
      _
    // Predicated region
    $region34: #{tpu_custom_call.1} parent=1 // pred_check
      _
    $region35: #{tpu_custom_call.1} parent=1 // pred_check_branch
      %557 = sbr.rel (0) target = $region37
    $region36: #{tpu_custom_call.1} parent=1 // pred_region
      %s559 = ssub.s32 512, 512
      %560 = vsyncadd [#allocation10], %s559
      %s561 = sshll.u32 [#allocation9], 4
      %s562 = int_to_ptr.vmem [resolvable:$true] %s561
      %567 = dma.vmem_to_hbm [thread:$0]  %s562, 512, %s5, [#allocation10], 128, 128, 8
    $region37: #{tpu_custom_call.1} parent=1 // pred_fallthru
      _
    // Predicated region
    $region38: #{tpu_custom_call.1} parent=1 // pred_check
      _
    $region39: #{tpu_custom_call.1} parent=1 // pred_check_branch
      %569 = sbr.rel (0) target = $region41
    $region40: #{tpu_custom_call.1} parent=1 // pred_region
      %570 = dma.done [#allocation4], 512
    $region41: #{tpu_custom_call.1} parent=1 // pred_fallthru
      _
    // Predicated region
    $region42: #{tpu_custom_call.1} parent=1 // pred_check
      _
    $region43: #{tpu_custom_call.1} parent=1 // pred_check_branch
      %572 = sbr.rel (0) target = $region45
    $region44: #{tpu_custom_call.1} parent=1 // pred_region
      %573 = dma.done [#allocation10], 512
    $region45: #{tpu_custom_call.1} parent=1 // pred_fallthru
      _
    %574 = vsyncpa [#allocation3], 1
    %575 = vsyncpa [#allocation6], 1
    %576 = vsyncpa [#allocation4], 1
    %577 = vsyncpa [#allocation10], 1

</llo_original>
